<compile_context>
chip_gen: v6e
topology: v6e:2x2x1
jax: 0.10.0
libtpu: 0.0.40
codegen_flags: <defaults>
</compile_context>

<pallas_src>
import jax
import jax.numpy as jnp
import numpy as np
from jax.experimental import pallas as pl
from jax.experimental.pallas import tpu as pltpu

GLOBAL_Z_CHANNELS = 128   # module overrides z_channels with this
KERNEL_SIZE = 5
PADDING = 2
LANE = 128
SUBLANE = 8


def _softplus(x):
    # numerically stable log(1 + exp(x)) (safe to lower on Mosaic)
    return jnp.maximum(x, 0.0) + jnp.log(1.0 + jnp.exp(-jnp.abs(x)))


def vae_fgen_kernel(p_ref, w_ref, b_ref, mu_ref, scale_ref, kl_ref):
    """One grid step = one block of TR output rows (rows = flattened N*H*W).

    p_ref  : (2*TR, KKCp) bf16 -- rows [0:TR] = input patches, [TR:2TR] = target patches
    w_ref  : (KKCp, 2*Z)  bf16 -- conv weight as matmul matrix (rows zero-padded)
    b_ref  : (1, 2*Z)     f32  -- conv bias
    outputs: (TR, Z) f32 each  -- target mu, target scale, KL(target || input)
    """
    z = GLOBAL_Z_CHANNELS
    tr = mu_ref.shape[0]

    # fused conv-as-matmul for both inputs in a single MXU pass, f32 accumulation
    gd = jnp.dot(p_ref[...], w_ref[...], preferred_element_type=jnp.float32)
    gd = gd + b_ref[...]                       # single broadcast bias add

    mu_q, sr_q = gd[:tr, :z], gd[:tr, z:]      # input distribution (q)
    mu_p, sr_p = gd[tr:, :z], gd[tr:, z:]      # target distribution (p)

    sig_q = 0.1 + 0.9 * _softplus(sr_q)
    sig_p = 0.1 + 0.9 * _softplus(sr_p)

    # KL(N(mu_p, sig_p) || N(mu_q, sig_q)); one approx reciprocal, no divides
    inv_sig_q = pl.reciprocal(sig_q, approx=True)
    ratio = sig_p * inv_sig_q
    var_ratio = ratio * ratio
    diff = (mu_p - mu_q) * inv_sig_q
    kl = 0.5 * (var_ratio + diff * diff - 1.0 - jnp.log(var_ratio))

    mu_ref[...] = mu_p
    scale_ref[...] = sig_p
    kl_ref[...] = kl


def vae_function_generator_forward(representation, target_representation, weight_oihw, bias):
    """representation / target_representation: (N, Cin, H, W) float32 (NCHW, like PyTorch).
    weight_oihw: (2*Z, Cin, 5, 5), bias: (2*Z,).
    Returns (mu_t, scale_t, kl_z), each (N, Z, H, W)."""
    N, Cin, H, W = representation.shape
    Z = GLOBAL_Z_CHANNELS
    K = KERNEL_SIZE
    KKC = K * K * Cin
    KKCp = ((KKC + LANE - 1) // LANE) * LANE          # pad contraction dim to full lanes
    NR = N * H * W
    NRp = ((NR + SUBLANE - 1) // SUBLANE) * SUBLANE   # pad rows to sublane multiple

    # split rows across 2 parallel grid blocks when possible (v7x: 2 TensorCores)
    num_row_blocks = 2 if (NRp % (2 * SUBLANE) == 0) else 1
    TR = NRp // num_row_blocks

    def im2col(x_nchw):
        x = jnp.transpose(x_nchw, (0, 2, 3, 1))       # NHWC
        xp = jnp.pad(x, ((0, 0), (PADDING, PADDING), (PADDING, PADDING), (0, 0)))
        cols = [xp[:, kh:kh + H, kw:kw + W, :] for kh in range(K) for kw in range(K)]
        p = jnp.concatenate(cols, axis=-1).reshape(NR, KKC)
        p = jnp.pad(p, ((0, NRp - NR), (0, KKCp - KKC)))
        return p.astype(jnp.bfloat16)                 # bf16 halves DMA bytes, native MXU dtype

    # TODO(synk): for production-sized H/W/Cin, replace this wrapper im2col (25x data
    # amplification) with an in-kernel halo DMA + 25 shifted accumulating matmuls.
    p_in = im2col(representation)
    p_tg = im2col(target_representation)

    # Interleave per row-block so grid step i sees [input_block_i ; target_block_i]
    # and issues ONE (2*TR, KKCp) x (KKCp, 2Z) matmul for both distributions.
    stacked = jnp.stack(
        [p_in.reshape(num_row_blocks, TR, KKCp),
         p_tg.reshape(num_row_blocks, TR, KKCp)], axis=1)       # (nb, 2, TR, KKCp)
    patches = stacked.reshape(num_row_blocks * 2 * TR, KKCp)

    # (Cout, Cin, kh, kw) -> (kh, kw, Cin, Cout) -> (KKC, 2Z); matches the (kh, kw, ci)
    # ordering of the im2col concatenation above. Zero-pad rows to KKCp.
    w_mat = jnp.transpose(weight_oihw, (2, 3, 1, 0)).reshape(KKC, 2 * Z)
    w_mat = jnp.pad(w_mat, ((0, KKCp - KKC), (0, 0))).astype(jnp.bfloat16)
    b_row = bias.reshape(1, 2 * Z).astype(jnp.float32)

    out_block = pl.BlockSpec((TR, Z), lambda i: (i, 0))
    out_sds = jax.ShapeDtypeStruct((NRp, Z), jnp.float32)

    mu, scale, kl = pl.pallas_call(
        vae_fgen_kernel,
        grid=(num_row_blocks,),
        in_specs=[
            pl.BlockSpec((2 * TR, KKCp), lambda i: (i, 0)),
            pl.BlockSpec((KKCp, 2 * Z), lambda i: (0, 0)),
            pl.BlockSpec((1, 2 * Z), lambda i: (0, 0)),
        ],
        out_specs=(out_block, out_block, out_block),
        out_shape=(out_sds, out_sds, out_sds),
        compiler_params=pltpu.CompilerParams(
            dimension_semantics=("parallel",)),
    )(patches, w_mat, b_row)

    def to_nchw(x):
        return jnp.transpose(x[:NR].reshape(N, H, W, Z), (0, 3, 1, 2))

    return to_nchw(mu), to_nchw(scale), to_nchw(kl)


def ref_forward(rep, tgt, weight, bias):
    """Pure-JAX reference of the PyTorch forward (train=True)."""
    Z = GLOBAL_Z_CHANNELS

    def z_dist(x):
        y = jax.lax.conv_general_dilated(
            x, weight, window_strides=(1, 1),
            padding=((PADDING, PADDING), (PADDING, PADDING)),
            dimension_numbers=("NCHW", "OIHW", "NCHW"))
        y = y + bias[None, :, None, None]
        mu, sr = y[:, :Z], y[:, Z:]
        return mu, 0.1 + 0.9 * jax.nn.softplus(sr)

    mu_q, sig_q = z_dist(rep)
    mu_p, sig_p = z_dist(tgt)
    var_ratio = (sig_p / sig_q) ** 2
    t1 = ((mu_p - mu_q) / sig_q) ** 2
    kl = 0.5 * (var_ratio + t1 - 1.0 - jnp.log(var_ratio))
    return mu_p, sig_p, kl


if __name__ == "__main__":
    key = jax.random.PRNGKey(0)
    k1, k2, k3, k4 = jax.random.split(key, 4)

    N, Cin, H, W = 2, 4, 16, 16   # input_shape = (N, Cin, H, W)
    Z = GLOBAL_Z_CHANNELS

    representation = jax.random.normal(k1, (N, Cin, H, W), jnp.float32)
    target_representation = jax.random.normal(k2, (N, Cin, H, W), jnp.float32)

    # deterministic synthetic parameters (Conv2d(Cin, 2*Z, 5, padding=2))
    weight = 0.05 * jax.random.normal(k3, (2 * Z, Cin, KERNEL_SIZE, KERNEL_SIZE), jnp.float32)
    bias = 0.05 * jax.random.normal(k4, (2 * Z,), jnp.float32)

    mu_t, scale_t, kl_z = vae_function_generator_forward(
        representation, target_representation, weight, bias)
    jax.block_until_ready((mu_t, scale_t, kl_z))

    # Reference: round conv inputs/weights to bf16 (matching the kernel's MXU dtype)
    # so the comparison isolates kernel math; accumulation and elementwise stay f32.
    # Tolerance accounts for MXU accumulation order and the approx reciprocal (~1e-3 rel).
    def q(x):
        return x.astype(jnp.bfloat16).astype(jnp.float32)

    mu_r, sc_r, kl_r = ref_forward(q(representation), q(target_representation), q(weight), bias)
    assert np.allclose(np.asarray(mu_t), np.asarray(mu_r), rtol=1e-2, atol=1e-2)
    assert np.allclose(np.asarray(scale_t), np.asarray(sc_r), rtol=1e-2, atol=1e-2)
    assert np.allclose(np.asarray(kl_z), np.asarray(kl_r), rtol=1e-2, atol=1e-2)

    print("KERNEL_OK")
</pallas_src>

<mosaic_0001>
module attributes {stable_mosaic.version = 11 : i64} {
  func.func @vae_fgen_kernel(%arg0: i32, %arg1: memref<512x128xbf16, #tpu.memory_space<vmem>>, %arg2: memref<128x256xbf16, #tpu.memory_space<vmem>>, %arg3: memref<1x256xf32, #tpu.memory_space<vmem>>, %arg4: memref<256x128xf32, #tpu.memory_space<vmem>>, %arg5: memref<256x128xf32, #tpu.memory_space<vmem>>, %arg6: memref<256x128xf32, #tpu.memory_space<vmem>>) attributes {dimension_semantics = [#tpu.dimension_semantics<parallel>], iteration_bounds = array<i64: 2>, scalar_prefetch = 0 : i64, scratch_operands = 0 : i64, tpu.core_type = #tpu.core_type<tc>, window_params = [{transform_indices = @transform_0, window_bounds = array<i64: 512, 128>}, {pipeline_mode = #tpu.pipeline_mode<synchronous>, transform_indices = @transform_1, window_bounds = array<i64: 128, 256>}, {pipeline_mode = #tpu.pipeline_mode<synchronous>, transform_indices = @transform_2, window_bounds = array<i64: 1, 256>}, {transform_indices = @transform_3, window_bounds = array<i64: 256, 128>}, {transform_indices = @transform_4, window_bounds = array<i64: 256, 128>}, {transform_indices = @transform_5, window_bounds = array<i64: 256, 128>}]} {
    %c0 = arith.constant 0 : index
    %c0_0 = arith.constant 0 : index
    %0 = vector.load %arg1[%c0, %c0_0] : memref<512x128xbf16, #tpu.memory_space<vmem>>, vector<512x128xbf16>
    %c0_1 = arith.constant 0 : index
    %c0_2 = arith.constant 0 : index
    %1 = vector.load %arg2[%c0_1, %c0_2] : memref<128x256xbf16, #tpu.memory_space<vmem>>, vector<128x256xbf16>
    %cst = arith.constant dense<0.000000e+00> : vector<512x256xf32>
    %2 = tpu.matmul %0, %1, %cst {dimension_numbers = #tpu.dot_dimension_numbers<[1], [0], [0], [1], [0, 0, 1, 1], [], []>} : vector<512x128xbf16>, vector<128x256xbf16>, vector<512x256xf32> -> vector<512x256xf32>
    %c0_3 = arith.constant 0 : index
    %c0_4 = arith.constant 0 : index
    %3 = vector.load %arg3[%c0_3, %c0_4] : memref<1x256xf32, #tpu.memory_space<vmem>>, vector<1x256xf32>
    %4 = vector.broadcast %3 : vector<1x256xf32> to vector<512x256xf32>
    %5 = arith.addf %2, %4 : vector<512x256xf32>
    %6 = vector.extract_strided_slice %5 {offsets = [0, 0], sizes = [256, 128], strides = [1, 1]} : vector<512x256xf32> to vector<256x128xf32>
    %7 = vector.extract_strided_slice %5 {offsets = [0, 128], sizes = [256, 128], strides = [1, 1]} : vector<512x256xf32> to vector<256x128xf32>
    %8 = vector.extract_strided_slice %5 {offsets = [256, 0], sizes = [256, 128], strides = [1, 1]} : vector<512x256xf32> to vector<256x128xf32>
    %9 = vector.extract_strided_slice %5 {offsets = [256, 128], sizes = [256, 128], strides = [1, 1]} : vector<512x256xf32> to vector<256x128xf32>
    %cst_5 = arith.constant 0.000000e+00 : f32
    %10 = vector.broadcast %cst_5 : f32 to vector<256x128xf32>
    %11 = arith.maximumf %7, %10 : vector<256x128xf32>
    %12 = math.absf %7 : vector<256x128xf32>
    %cst_6 = arith.constant 0.000000e+00 : f32
    %13 = vector.broadcast %cst_6 : f32 to vector<256x128xf32>
    %14 = arith.subf %13, %12 : vector<256x128xf32>
    %15 = math.exp %14 : vector<256x128xf32>
    %cst_7 = arith.constant 1.000000e+00 : f32
    %16 = vector.broadcast %cst_7 : f32 to vector<256x128xf32>
    %17 = arith.addf %16, %15 : vector<256x128xf32>
    %18 = math.log %17 : vector<256x128xf32>
    %19 = arith.addf %11, %18 : vector<256x128xf32>
    %cst_8 = arith.constant 0.899999976 : f32
    %20 = vector.broadcast %cst_8 : f32 to vector<256x128xf32>
    %21 = arith.mulf %20, %19 : vector<256x128xf32>
    %cst_9 = arith.constant 1.000000e-01 : f32
    %22 = vector.broadcast %cst_9 : f32 to vector<256x128xf32>
    %23 = arith.addf %22, %21 : vector<256x128xf32>
    %cst_10 = arith.constant 0.000000e+00 : f32
    %24 = vector.broadcast %cst_10 : f32 to vector<256x128xf32>
    %25 = arith.maximumf %9, %24 : vector<256x128xf32>
    %26 = math.absf %9 : vector<256x128xf32>
    %cst_11 = arith.constant 0.000000e+00 : f32
    %27 = vector.broadcast %cst_11 : f32 to vector<256x128xf32>
    %28 = arith.subf %27, %26 : vector<256x128xf32>
    %29 = math.exp %28 : vector<256x128xf32>
    %cst_12 = arith.constant 1.000000e+00 : f32
    %30 = vector.broadcast %cst_12 : f32 to vector<256x128xf32>
    %31 = arith.addf %30, %29 : vector<256x128xf32>
    %32 = math.log %31 : vector<256x128xf32>
    %33 = arith.addf %25, %32 : vector<256x128xf32>
    %cst_13 = arith.constant 0.899999976 : f32
    %34 = vector.broadcast %cst_13 : f32 to vector<256x128xf32>
    %35 = arith.mulf %34, %33 : vector<256x128xf32>
    %cst_14 = arith.constant 1.000000e-01 : f32
    %36 = vector.broadcast %cst_14 : f32 to vector<256x128xf32>
    %37 = arith.addf %36, %35 : vector<256x128xf32>
    %38 = tpu.reciprocal %23 {approx = true} : vector<256x128xf32> -> vector<256x128xf32>
    %39 = arith.mulf %37, %38 : vector<256x128xf32>
    %40 = arith.mulf %39, %39 : vector<256x128xf32>
    %41 = arith.subf %8, %6 : vector<256x128xf32>
    %42 = arith.mulf %41, %38 : vector<256x128xf32>
    %43 = arith.mulf %42, %42 : vector<256x128xf32>
    %44 = arith.addf %40, %43 : vector<256x128xf32>
    %cst_15 = arith.constant 1.000000e+00 : f32
    %45 = vector.broadcast %cst_15 : f32 to vector<256x128xf32>
    %46 = arith.subf %44, %45 : vector<256x128xf32>
    %47 = math.log %40 : vector<256x128xf32>
    %48 = arith.subf %46, %47 : vector<256x128xf32>
    %cst_16 = arith.constant 5.000000e-01 : f32
    %49 = vector.broadcast %cst_16 : f32 to vector<256x128xf32>
    %50 = arith.mulf %49, %48 : vector<256x128xf32>
    %c0_17 = arith.constant 0 : index
    %c0_18 = arith.constant 0 : index
    %51 = vector.load %arg4[%c0_17, %c0_18] : memref<256x128xf32, #tpu.memory_space<vmem>>, vector<256x128xf32>
    tpu.vector_store %arg4[%c0_17, %c0_18], %8 {strides = array<i32>} : memref<256x128xf32, #tpu.memory_space<vmem>>, vector<256x128xf32>,
    %c0_19 = arith.constant 0 : index
    %c0_20 = arith.constant 0 : index
    %52 = vector.load %arg5[%c0_19, %c0_20] : memref<256x128xf32, #tpu.memory_space<vmem>>, vector<256x128xf32>
    tpu.vector_store %arg5[%c0_19, %c0_20], %37 {strides = array<i32>} : memref<256x128xf32, #tpu.memory_space<vmem>>, vector<256x128xf32>,
    %c0_21 = arith.constant 0 : index
    %c0_22 = arith.constant 0 : index
    %53 = vector.load %arg6[%c0_21, %c0_22] : memref<256x128xf32, #tpu.memory_space<vmem>>, vector<256x128xf32>
    tpu.vector_store %arg6[%c0_21, %c0_22], %50 {strides = array<i32>} : memref<256x128xf32, #tpu.memory_space<vmem>>, vector<256x128xf32>,
    return
  }
  func.func @transform_0(%arg0: i32) -> (i32, i32) {
    %c0_i32 = arith.constant 0 : i32
    %c0_i32_0 = arith.constant 0 : i32
    return %arg0, %c0_i32 : i32, i32
  }
  func.func @transform_1(%arg0: i32) -> (i32, i32) {
    %c0_i32 = arith.constant 0 : i32
    %c0_i32_0 = arith.constant 0 : i32
    %c0_i32_1 = arith.constant 0 : i32
    return %c0_i32, %c0_i32_0 : i32, i32
  }
  func.func @transform_2(%arg0: i32) -> (i32, i32) {
    %c0_i32 = arith.constant 0 : i32
    %c0_i32_0 = arith.constant 0 : i32
    %c0_i32_1 = arith.constant 0 : i32
    return %c0_i32, %c0_i32_0 : i32, i32
  }
  func.func @transform_3(%arg0: i32) -> (i32, i32) {
    %c0_i32 = arith.constant 0 : i32
    %c0_i32_0 = arith.constant 0 : i32
    return %arg0, %c0_i32 : i32, i32
  }
  func.func @transform_4(%arg0: i32) -> (i32, i32) {
    %c0_i32 = arith.constant 0 : i32
    %c0_i32_0 = arith.constant 0 : i32
    return %arg0, %c0_i32 : i32, i32
  }
  func.func @transform_5(%arg0: i32) -> (i32, i32) {
    %c0_i32 = arith.constant 0 : i32
    %c0_i32_0 = arith.constant 0 : i32
    return %arg0, %c0_i32 : i32, i32
  }
}

</mosaic_0001>

<llo_original>
// kernel: tpu_custom_call.1
$region0: #{tpu_custom_call.1}
  #allocation0 [shape = 'u32[]', space=smem, size = 0x4, offset = 0x4, fixed_abs, tag = 'smem constant byte address 0x4 - core index']
  #allocation1 [shape = 'u32[144,128]{1,0:T(1,128)}', space=vmem, size = 0x12000, scoped, tag = 'internal scratch']
  %s0 = inlined_call_operand.hbm [shape: bf16[1024,128], index: 0, kind: input, shape index: {}]
  %s1 = inlined_call_operand.hbm [shape: bf16[128,256], index: 1, kind: input, shape index: {}]
  %s2 = inlined_call_operand.vmem [shape: f32[1,256], index: 2, kind: input, shape index: {}]
  %s3 = inlined_call_operand.hbm [shape: f32[512,128], index: 3, kind: output, shape index: {0}]
  %s4 = inlined_call_operand.hbm [shape: f32[512,128], index: 4, kind: output, shape index: {1}]
  %s5 = inlined_call_operand.hbm [shape: f32[512,128], index: 5, kind: output, shape index: {2}]
  %6 = xla_tuple %s3, %s4, %s5
  %s7 = sld [smem:[#allocation0]]
  $region69: #{tpu_custom_call.1} parent=0
    _
  %s9 = ssub.s32 1, %s7
  %s10 = scalar_select 0, %s9, %s7
  $region1: #{tpu_custom_call.1} parent=0
    #allocation2 [shape = 'u8[262144]{0}', space=vmem, size = 0x40000, scoped, tag = 'input window, operand 0']
    #allocation3 [shape = 's32[2]{0}', space=sflag, size = 0x8, scoped, tag = 'scoped memory for tpu_custom_call.1']
    #allocation4 [shape = 's32[2]{0}', space=sflag, size = 0x8, scoped, tag = 'scoped memory for tpu_custom_call.1']
    #allocation5 [shape = 'u8[65536]{0}', space=vmem, size = 0x10000, scoped, tag = 'input window, operand 1, single buffered']
    #allocation6 [shape = 's32[1]{0}', space=sflag, size = 0x4, scoped, tag = 'scoped memory for tpu_custom_call.1']
    #allocation7 [shape = 'u8[262144]{0}', space=vmem, size = 0x40000, scoped, tag = 'output window, operand 0']
    #allocation8 [shape = 'u8[262144]{0}', space=vmem, size = 0x40000, scoped, tag = 'output window, operand 1']
    #allocation9 [shape = 's32[2]{0}', space=sflag, size = 0x8, scoped, tag = 'scoped memory for tpu_custom_call.1']
    #allocation10 [shape = 'u8[262144]{0}', space=vmem, size = 0x40000, scoped, tag = 'output window, operand 2']
    %11 = vsyncpa [#allocation3], 0
    %s12 = scalar_lea.sflag [#allocation3], 1
    %13 = vsyncpa %s12, 0
    %14 = vsyncpa [#allocation6], 0
    %15 = vsyncpa [#allocation4], 0
    %s16 = scalar_lea.sflag [#allocation4], 1
    %17 = vsyncpa %s16, 0
    %18 = vsyncpa [#allocation9], 0
    %s19 = scalar_lea.sflag [#allocation9], 1
    %20 = vsyncpa %s19, 0
    loop: start=0, step=1, limit=4
    $region2: #{tpu_custom_call.1} parent=1 // loop_pre_header
      _
    $region3: #{tpu_custom_call.1} parent=1 // loop_header
      %s22 = sphi 0, %s26
      %p23 = scmp.ge.s32.totalorder %s22, 4
      %s32 = sphi 0, %s34
      %s35 = sphi 0, %s32
      %s36 = sphi 0, %s35
      %s52 = sphi 0, %s36
      %s56 = sphi 0, %s56
      %s58 = sphi 0, %s56
      %s59 = sphi 0, %s58
      %s73 = sphi 0, %s59
      %s77 = sphi 0, %s77
      %s79 = sphi 0, %s77
      %s80 = sphi 0, %s79
      %s94 = sphi 0, %s80
      %s100 = sphi 0, %s102
      %s103 = sphi 0, %s100
      %s104 = sphi 0, %s103
      %s120 = sphi 0, %s104
      %s126 = sphi 0, %s128
      %s129 = sphi 0, %s126
      %s130 = sphi 0, %s129
      %s146 = sphi 0, %s130
      %s152 = sphi 0, %s154
      %s155 = sphi 0, %s152
      %s156 = sphi 0, %s155
      %s172 = sphi 0, %s156
    $region4: #{tpu_custom_call.1} parent=1 // loop_header_branch
      %25 = sbr.rel (%p23) target = $region8
    $region5: #{tpu_custom_call.1} parent=1 // loop_body
      %s27 = ssub.s32 %s22, 1
      %s28 = ssub.s32 %s22, 2
      %s29 = sadd.s32 %s22, 1
      %s30 = ssub.s32 %s22, %s29
      %p31 = scmp.eq.s32.totalorder %s30, 0
      %s33 = sadd.s32 %s32, 1
      %s34 = scalar_select %p31, %s32, %s33
      %p37 = pneg %p31
      %p38 = scmp.eq.s32.totalorder %s22, 1
      %p39 = por %p37, %p38
      %p40 = scmp.ne.s32.totalorder %s32, %s35
      %p41 = scmp.eq.s32.totalorder %s22, 0
      %p42 = por %p40, %p41
      %p43 = scmp.ne.s32.totalorder %s32, %s35
      %p44 = scmp.eq.s32.totalorder %s27, 1
      %p45 = por %p43, %p44
      %p46 = scmp.ne.s32.totalorder %s35, %s36
      %p47 = scmp.eq.s32.totalorder %s27, 0
      %p48 = por %p46, %p47
      %p49 = scmp.ne.s32.totalorder %s35, %s36
      %p50 = scmp.eq.s32.totalorder %s28, 1
      %p51 = por %p49, %p50
      %p53 = scmp.ne.s32.totalorder %s36, %s52
      %p54 = scmp.eq.s32.totalorder %s28, 0
      %p55 = por %p53, %p54
      %s57 = sadd.s32 %s56, 1
      %p60 = scmp.eq.s32.totalorder %s22, 1
      %p61 = scmp.ne.s32.totalorder %s56, %s58
      %p62 = scmp.eq.s32.totalorder %s22, 0
      %p63 = por %p61, %p62
      %p64 = scmp.ne.s32.totalorder %s56, %s58
      %p65 = scmp.eq.s32.totalorder %s27, 1
      %p66 = por %p64, %p65
      %p67 = scmp.ne.s32.totalorder %s58, %s59
      %p68 = scmp.eq.s32.totalorder %s27, 0
      %p69 = por %p67, %p68
      %p70 = scmp.ne.s32.totalorder %s58, %s59
      %p71 = scmp.eq.s32.totalorder %s28, 1
      %p72 = por %p70, %p71
      %p74 = scmp.ne.s32.totalorder %s59, %s73
      %p75 = scmp.eq.s32.totalorder %s28, 0
      %p76 = por %p74, %p75
      %s78 = sadd.s32 %s77, 1
      %p81 = scmp.eq.s32.totalorder %s22, 1
      %p82 = scmp.ne.s32.totalorder %s77, %s79
      %p83 = scmp.eq.s32.totalorder %s22, 0
      %p84 = por %p82, %p83
      %p85 = scmp.ne.s32.totalorder %s77, %s79
      %p86 = scmp.eq.s32.totalorder %s27, 1
      %p87 = por %p85, %p86
      %p88 = scmp.ne.s32.totalorder %s79, %s80
      %p89 = scmp.eq.s32.totalorder %s27, 0
      %p90 = por %p88, %p89
      %p91 = scmp.ne.s32.totalorder %s79, %s80
      %p92 = scmp.eq.s32.totalorder %s28, 1
      %p93 = por %p91, %p92
      %p95 = scmp.ne.s32.totalorder %s80, %s94
      %p96 = scmp.eq.s32.totalorder %s28, 0
      %p97 = por %p95, %p96
      %s98 = ssub.s32 %s22, %s29
      %p99 = scmp.eq.s32.totalorder %s98, 0
      %s101 = sadd.s32 %s100, 1
      %s102 = scalar_select %p99, %s100, %s101
      %p105 = pneg %p99
      %p106 = scmp.eq.s32.totalorder %s22, 1
      %p107 = por %p105, %p106
      %p108 = scmp.ne.s32.totalorder %s100, %s103
      %p109 = scmp.eq.s32.totalorder %s22, 0
      %p110 = por %p108, %p109
      %p111 = scmp.ne.s32.totalorder %s100, %s103
      %p112 = scmp.eq.s32.totalorder %s27, 1
      %p113 = por %p111, %p112
      %p114 = scmp.ne.s32.totalorder %s103, %s104
      %p115 = scmp.eq.s32.totalorder %s27, 0
      %p116 = por %p114, %p115
      %p117 = scmp.ne.s32.totalorder %s103, %s104
      %p118 = scmp.eq.s32.totalorder %s28, 1
      %p119 = por %p117, %p118
      %p121 = scmp.ne.s32.totalorder %s104, %s120
      %p122 = scmp.eq.s32.totalorder %s28, 0
      %p123 = por %p121, %p122
      %s124 = ssub.s32 %s22, %s29
      %p125 = scmp.eq.s32.totalorder %s124, 0
      %s127 = sadd.s32 %s126, 1
      %s128 = scalar_select %p125, %s126, %s127
      %p131 = pneg %p125
      %p132 = scmp.eq.s32.totalorder %s22, 1
      %p133 = por %p131, %p132
      %p134 = scmp.ne.s32.totalorder %s126, %s129
      %p135 = scmp.eq.s32.totalorder %s22, 0
      %p136 = por %p134, %p135
      %p137 = scmp.ne.s32.totalorder %s126, %s129
      %p138 = scmp.eq.s32.totalorder %s27, 1
      %p139 = por %p137, %p138
      %p140 = scmp.ne.s32.totalorder %s129, %s130
      %p141 = scmp.eq.s32.totalorder %s27, 0
      %p142 = por %p140, %p141
      %p143 = scmp.ne.s32.totalorder %s129, %s130
      %p144 = scmp.eq.s32.totalorder %s28, 1
      %p145 = por %p143, %p144
      %p147 = scmp.ne.s32.totalorder %s130, %s146
      %p148 = scmp.eq.s32.totalorder %s28, 0
      %p149 = por %p147, %p148
      %s150 = ssub.s32 %s22, %s29
      %p151 = scmp.eq.s32.totalorder %s150, 0
      %s153 = sadd.s32 %s152, 1
      %s154 = scalar_select %p151, %s152, %s153
      %p157 = pneg %p151
      %p158 = scmp.eq.s32.totalorder %s22, 1
      %p159 = por %p157, %p158
      %p160 = scmp.ne.s32.totalorder %s152, %s155
      %p161 = scmp.eq.s32.totalorder %s22, 0
      %p162 = por %p160, %p161
      %p163 = scmp.ne.s32.totalorder %s152, %s155
      %p164 = scmp.eq.s32.totalorder %s27, 1
      %p165 = por %p163, %p164
      %p166 = scmp.ne.s32.totalorder %s155, %s156
      %p167 = scmp.eq.s32.totalorder %s27, 0
      %p168 = por %p166, %p167
      %p169 = scmp.ne.s32.totalorder %s155, %s156
      %p170 = scmp.eq.s32.totalorder %s28, 1
      %p171 = por %p169, %p170
      %p173 = scmp.ne.s32.totalorder %s156, %s172
      %p174 = scmp.eq.s32.totalorder %s28, 0
      %p175 = por %p173, %p174
      %p176 = scmp.le.s32.totalorder 1, %s22
      %p177 = scmp.lt.s32.totalorder %s22, 3
      %p178 = pnand %p176, %p177
      %p179 = pneg %p178
      // Predicated region
      $region9: #{tpu_custom_call.1} parent=5 // pred_check
        _
      $region10: #{tpu_custom_call.1} parent=5 // pred_check_branch
        %181 = sbr.rel (%p178) target = $region12
      $region11: #{tpu_custom_call.1} parent=5 // pred_region
        %s182 = ssub.s32 %s22, 1
        // Predicated region
        $region13: #{tpu_custom_call.1} parent=11 // pred_check
          %p183 = pneg %p69
        $region14: #{tpu_custom_call.1} parent=11 // pred_check_branch
          %185 = sbr.rel (%p183) target = $region16
        $region15: #{tpu_custom_call.1} parent=11 // pred_region
          %s187 = ssub.s32 2048, 2048
          %188 = vsyncadd [#allocation6], %s187
          %s189 = sshll.u32 [#allocation5], 4
          %s190 = int_to_ptr.vmem [resolvable:$true] %s189
          %195 = dma.hbm_to_vmem [thread:$0]  %s1, 2048, %s190, [#allocation6], 128, 128, 8
        $region16: #{tpu_custom_call.1} parent=11 // pred_fallthru
          _
        // Predicated region
        $region17: #{tpu_custom_call.1} parent=11 // pred_check
          %p196 = pneg %p90
        $region18: #{tpu_custom_call.1} parent=11 // pred_check_branch
          %198 = sbr.rel (%p196) target = $region20
        $region19: #{tpu_custom_call.1} parent=11 // pred_region
          _
        $region20: #{tpu_custom_call.1} parent=11 // pred_fallthru
          _
      $region12: #{tpu_custom_call.1} parent=5 // pred_fallthru
        _
      %p199 = scmp.lt.s32.totalorder %s22, 2
      // Predicated region
      $region21: #{tpu_custom_call.1} parent=5 // pred_check
        %p200 = pneg %p199
      $region22: #{tpu_custom_call.1} parent=5 // pred_check_branch
        %202 = sbr.rel (%p200) target = $region24
      $region23: #{tpu_custom_call.1} parent=5 // pred_region
        // Predicated region
        $region25: #{tpu_custom_call.1} parent=23 // pred_check
          %p203 = pneg %p42
        $region26: #{tpu_custom_call.1} parent=23 // pred_check_branch
          %205 = sbr.rel (%p203) target = $region28
        $region27: #{tpu_custom_call.1} parent=23 // pred_region
          %s206 = sand.u32 %s32, 1
          %s207 = scalar_lea.sflag [#allocation3], %s206
          %s208 = sand.u32 %s32, 1
          %s209 = smul.addr %s208, 256
          %s210 = scalar_lea.vmem [#allocation2], %s209
          %s211 = smul.u32 64, %s22
          %s213 = ssub.s32 4096, 4096
          %214 = vsyncadd %s207, %s213
          %s215 = smul.addr %s211, 64
          %s216 = scalar_lea.hbm %s0, %s215
          %s217 = sshll.u32 %s210, 4
          %s218 = int_to_ptr.vmem [resolvable:$true] %s217
          %223 = dma.hbm_to_vmem [thread:$0]  %s216, 4096, %s218, %s207, 64, 64, 4
        $region28: #{tpu_custom_call.1} parent=23 // pred_fallthru
          _
      $region24: #{tpu_custom_call.1} parent=5 // pred_fallthru
        _
      %p224 = scmp.le.s32.totalorder 1, %s22
      %p225 = scmp.lt.s32.totalorder %s22, 3
      %p226 = pnand %p224, %p225
      %p227 = pneg %p226
      // Predicated region
      $region29: #{tpu_custom_call.1} parent=5 // pred_check
        _
      $region30: #{tpu_custom_call.1} parent=5 // pred_check_branch
        %229 = sbr.rel (%p226) target = $region32
      $region31: #{tpu_custom_call.1} parent=5 // pred_region
        %s230 = ssub.s32 %s22, 1
        %s231 = sand.u32 %s35, 1
        %s232 = scalar_lea.sflag [#allocation3], %s231
        %s233 = sand.u32 %s35, 1
        %s234 = smul.addr %s233, 256
        %s235 = scalar_lea.vmem [#allocation2], %s234
        // Predicated region
        $region33: #{tpu_custom_call.1} parent=31 // pred_check
          %p236 = pneg %p48
        $region34: #{tpu_custom_call.1} parent=31 // pred_check_branch
          %238 = sbr.rel (%p236) target = $region36
        $region35: #{tpu_custom_call.1} parent=31 // pred_region
          %239 = dma.done %s232, 4096
        $region36: #{tpu_custom_call.1} parent=31 // pred_fallthru
          _
        // Predicated region
        $region37: #{tpu_custom_call.1} parent=31 // pred_check
          %p240 = pneg %p69
        $region38: #{tpu_custom_call.1} parent=31 // pred_check_branch
          %242 = sbr.rel (%p240) target = $region40
        $region39: #{tpu_custom_call.1} parent=31 // pred_region
          %243 = dma.done [#allocation6], 2048
        $region40: #{tpu_custom_call.1} parent=31 // pred_fallthru
          _
        %s244 = sand.u32 %s35, 1
        %s245 = scalar_lea.sflag [#allocation3], %s244
        %s246 = sand.u32 %s35, 1
        %s247 = smul.addr %s246, 256
        %s248 = scalar_lea.vmem [#allocation2], %s247
        %p249 = pneg %p48
        %p250 = pneg %p45
        %p251 = pneg %p69
        %p252 = pneg %p66
        %p253 = pneg %p90
        %p254 = pneg %p87
        %p255 = pneg %p116
        %p256 = pneg %p113
        %s257 = sand.u32 %s103, 1
        %s258 = scalar_lea.sflag [#allocation4], %s257
        %s259 = sand.u32 %s103, 1
        %s260 = smul.addr %s259, 256
        %s261 = scalar_lea.vmem [#allocation7], %s260
        %p262 = pneg %p142
        %p263 = pneg %p139
        %s264 = sand.u32 %s27, 1
        %s265 = scalar_lea.sflag [#allocation9], %s264
        %s266 = sand.u32 %s129, 1
        %s267 = smul.addr %s266, 256
        %s268 = scalar_lea.vmem [#allocation8], %s267
        %p269 = pneg %p168
        %p270 = pneg %p165
        %s271 = sand.u32 %s27, 1
        %s272 = scalar_lea.sflag [#allocation9], %s271
        %s273 = sand.u32 %s155, 1
        %s274 = smul.addr %s273, 256
        %s275 = scalar_lea.vmem [#allocation10], %s274
        %s276 = smul.u32 64, %s27
        %s277 = smul.u32 32, %s27
        %s278 = smul.u32 32, %s27
        %s279 = smul.u32 32, %s27
        %v281 = vld [vmem:[%s235] sm:$0xf]
        %v282 = vld [vmem:[%s235 + $0x4] sm:$0xf]
        %v283 = vld [vmem:[%s235 + $0x8] sm:$0xf]
        %v284 = vld [vmem:[%s235 + $0xc] sm:$0xf]
        %v285 = vld [vmem:[%s235 + $0x10] sm:$0xf]
        %v286 = vld [vmem:[%s235 + $0x14] sm:$0xf]
        %v287 = vld [vmem:[%s235 + $0x18] sm:$0xf]
        %v288 = vld [vmem:[%s235 + $0x1c] sm:$0xf]
        %v289 = vld [vmem:[%s235 + $0x20] sm:$0xf]
        %v290 = vld [vmem:[%s235 + $0x24] sm:$0xf]
        %v291 = vld [vmem:[%s235 + $0x28] sm:$0xf]
        %v292 = vld [vmem:[%s235 + $0x2c] sm:$0xf]
        %v293 = vld [vmem:[%s235 + $0x30] sm:$0xf]
        %v294 = vld [vmem:[%s235 + $0x34] sm:$0xf]
        %v295 = vld [vmem:[%s235 + $0x38] sm:$0xf]
        %v296 = vld [vmem:[%s235 + $0x3c] sm:$0xf]
        %v297 = vld [vmem:[%s235 + $0x40] sm:$0xf]
        %v298 = vld [vmem:[%s235 + $0x44] sm:$0xf]
        %v299 = vld [vmem:[%s235 + $0x48] sm:$0xf]
        %v300 = vld [vmem:[%s235 + $0x4c] sm:$0xf]
        %v301 = vld [vmem:[%s235 + $0x50] sm:$0xf]
        %v302 = vld [vmem:[%s235 + $0x54] sm:$0xf]
        %v303 = vld [vmem:[%s235 + $0x58] sm:$0xf]
        %v304 = vld [vmem:[%s235 + $0x5c] sm:$0xf]
        %v305 = vld [vmem:[%s235 + $0x60] sm:$0xf]
        %v306 = vld [vmem:[%s235 + $0x64] sm:$0xf]
        %v307 = vld [vmem:[%s235 + $0x68] sm:$0xf]
        %v308 = vld [vmem:[%s235 + $0x6c] sm:$0xf]
        %v309 = vld [vmem:[%s235 + $0x70] sm:$0xf]
        %v310 = vld [vmem:[%s235 + $0x74] sm:$0xf]
        %v311 = vld [vmem:[%s235 + $0x78] sm:$0xf]
        %v312 = vld [vmem:[%s235 + $0x7c] sm:$0xf]
        %v313 = vld [vmem:[%s235 + $0x80] sm:$0xf]
        %v314 = vld [vmem:[%s235 + $0x84] sm:$0xf]
        %v315 = vld [vmem:[%s235 + $0x88] sm:$0xf]
        %v316 = vld [vmem:[%s235 + $0x8c] sm:$0xf]
        %v317 = vld [vmem:[%s235 + $0x90] sm:$0xf]
        %v318 = vld [vmem:[%s235 + $0x94] sm:$0xf]
        %v319 = vld [vmem:[%s235 + $0x98] sm:$0xf]
        %v320 = vld [vmem:[%s235 + $0x9c] sm:$0xf]
        %v321 = vld [vmem:[%s235 + $0xa0] sm:$0xf]
        %v322 = vld [vmem:[%s235 + $0xa4] sm:$0xf]
        %v323 = vld [vmem:[%s235 + $0xa8] sm:$0xf]
        %v324 = vld [vmem:[%s235 + $0xac] sm:$0xf]
        %v325 = vld [vmem:[%s235 + $0xb0] sm:$0xf]
        %v326 = vld [vmem:[%s235 + $0xb4] sm:$0xf]
        %v327 = vld [vmem:[%s235 + $0xb8] sm:$0xf]
        %v328 = vld [vmem:[%s235 + $0xbc] sm:$0xf]
        %v329 = vld [vmem:[%s235 + $0xc0] sm:$0xf]
        %v330 = vld [vmem:[%s235 + $0xc4] sm:$0xf]
        %v331 = vld [vmem:[%s235 + $0xc8] sm:$0xf]
        %v332 = vld [vmem:[%s235 + $0xcc] sm:$0xf]
        %v333 = vld [vmem:[%s235 + $0xd0] sm:$0xf]
        %v334 = vld [vmem:[%s235 + $0xd4] sm:$0xf]
        %v335 = vld [vmem:[%s235 + $0xd8] sm:$0xf]
        %v336 = vld [vmem:[%s235 + $0xdc] sm:$0xf]
        %v337 = vld [vmem:[%s235 + $0xe0] sm:$0xf]
        %v338 = vld [vmem:[%s235 + $0xe4] sm:$0xf]
        %v339 = vld [vmem:[%s235 + $0xe8] sm:$0xf]
        %v340 = vld [vmem:[%s235 + $0xec] sm:$0xf]
        %v341 = vld [vmem:[%s235 + $0xf0] sm:$0xf]
        %v342 = vld [vmem:[%s235 + $0xf4] sm:$0xf]
        %v343 = vld [vmem:[%s235 + $0xf8] sm:$0xf]
        %v344 = vld [vmem:[%s235 + $0xfc] sm:$0xf]
        %v345 = vld [vmem:[#allocation5] sm:$0xff]
        %v346 = vld [vmem:[#allocation5 + $0x8] sm:$0xff]
        %v347 = vld [vmem:[#allocation5 + $0x10] sm:$0xff]
        %v348 = vld [vmem:[#allocation5 + $0x18] sm:$0xff]
        %v349 = vld [vmem:[#allocation5 + $0x20] sm:$0xff]
        %v350 = vld [vmem:[#allocation5 + $0x28] sm:$0xff]
        %v351 = vld [vmem:[#allocation5 + $0x30] sm:$0xff]
        %v352 = vld [vmem:[#allocation5 + $0x38] sm:$0xff]
        %v353 = vld [vmem:[#allocation5 + $0x40] sm:$0xff]
        %v354 = vld [vmem:[#allocation5 + $0x48] sm:$0xff]
        %v355 = vld [vmem:[#allocation5 + $0x50] sm:$0xff]
        %v356 = vld [vmem:[#allocation5 + $0x58] sm:$0xff]
        %v357 = vld [vmem:[#allocation5 + $0x60] sm:$0xff]
        %v358 = vld [vmem:[#allocation5 + $0x68] sm:$0xff]
        %v359 = vld [vmem:[#allocation5 + $0x70] sm:$0xff]
        %v360 = vld [vmem:[#allocation5 + $0x78] sm:$0xff]
        %v361 = vld [vmem:[%s2] sm:$0x3]
        %v363 = vlaneseq
        %v364 = vshrl.u32 %v363, 7
        %v365 = vsub.s32 0, %v364
        %v366 = vrot.slane %v361, %v365
        %v367 = vlaneseq
        %v368 = vshrl.u32 %v367, 7
        %v369 = vsub.s32 1, %v368
        %v370 = vrot.slane %v361, %v369
        %v437 = vunpack.c.l.b16 %v281
        %v438 = vunpack.c.l.b16 %v282
        %v439 = vunpack.c.l.b16 %v283
        %v440 = vunpack.c.l.b16 %v284
        %v441 = vunpack.c.l.b16 %v285
        %v442 = vunpack.c.l.b16 %v286
        %v443 = vunpack.c.l.b16 %v287
        %v444 = vunpack.c.l.b16 %v288
        %v445 = vunpack.c.l.b16 %v289
        %v446 = vunpack.c.l.b16 %v290
        %v447 = vunpack.c.l.b16 %v291
        %v448 = vunpack.c.l.b16 %v292
        %v449 = vunpack.c.l.b16 %v293
        %v450 = vunpack.c.l.b16 %v294
        %v451 = vunpack.c.l.b16 %v295
        %v452 = vunpack.c.l.b16 %v296
        %v453 = vunpack.c.l.b16 %v297
        %v454 = vunpack.c.l.b16 %v298
        %v455 = vunpack.c.l.b16 %v299
        %v456 = vunpack.c.l.b16 %v300
        %v457 = vunpack.c.l.b16 %v301
        %v458 = vunpack.c.l.b16 %v302
        %v459 = vunpack.c.l.b16 %v303
        %v460 = vunpack.c.l.b16 %v304
        %v461 = vunpack.c.l.b16 %v305
        %v462 = vunpack.c.l.b16 %v306
        %v463 = vunpack.c.l.b16 %v307
        %v464 = vunpack.c.l.b16 %v308
        %v465 = vunpack.c.l.b16 %v309
        %v466 = vunpack.c.l.b16 %v310
        %v467 = vunpack.c.l.b16 %v311
        %v468 = vunpack.c.l.b16 %v312
        %v469 = vunpack.c.l.b16 %v313
        %v470 = vunpack.c.l.b16 %v314
        %v471 = vunpack.c.l.b16 %v315
        %v472 = vunpack.c.l.b16 %v316
        %v473 = vunpack.c.l.b16 %v317
        %v474 = vunpack.c.l.b16 %v318
        %v475 = vunpack.c.l.b16 %v319
        %v476 = vunpack.c.l.b16 %v320
        %v477 = vunpack.c.l.b16 %v321
        %v478 = vunpack.c.l.b16 %v322
        %v479 = vunpack.c.l.b16 %v323
        %v480 = vunpack.c.l.b16 %v324
        %v481 = vunpack.c.l.b16 %v325
        %v482 = vunpack.c.l.b16 %v326
        %v483 = vunpack.c.l.b16 %v327
        %v484 = vunpack.c.l.b16 %v328
        %v485 = vunpack.c.l.b16 %v329
        %v486 = vunpack.c.l.b16 %v330
        %v487 = vunpack.c.l.b16 %v331
        %v488 = vunpack.c.l.b16 %v332
        %v489 = vunpack.c.l.b16 %v333
        %v490 = vunpack.c.l.b16 %v334
        %v491 = vunpack.c.l.b16 %v335
        %v492 = vunpack.c.l.b16 %v336
        %v493 = vunpack.c.l.b16 %v337
        %v494 = vunpack.c.l.b16 %v338
        %v495 = vunpack.c.l.b16 %v339
        %v496 = vunpack.c.l.b16 %v340
        %v497 = vunpack.c.l.b16 %v341
        %v498 = vunpack.c.l.b16 %v342
        %v499 = vunpack.c.l.b16 %v343
        %v500 = vunpack.c.l.b16 %v344
        %v501 = vpack.c.b16 %v438, %v437
        %v502 = vpack.c.b16 %v440, %v439
        %v503 = vpack.c.b16 %v442, %v441
        %v504 = vpack.c.b16 %v444, %v443
        %v505 = vpack.c.b16 %v446, %v445
        %v506 = vpack.c.b16 %v448, %v447
        %v507 = vpack.c.b16 %v450, %v449
        %v508 = vpack.c.b16 %v452, %v451
        %v509 = vpack.c.b16 %v454, %v453
        %v510 = vpack.c.b16 %v456, %v455
        %v511 = vpack.c.b16 %v458, %v457
        %v512 = vpack.c.b16 %v460, %v459
        %v513 = vpack.c.b16 %v462, %v461
        %v514 = vpack.c.b16 %v464, %v463
        %v515 = vpack.c.b16 %v466, %v465
        %v516 = vpack.c.b16 %v468, %v467
        %v517 = vpack.c.b16 %v470, %v469
        %v518 = vpack.c.b16 %v472, %v471
        %v519 = vpack.c.b16 %v474, %v473
        %v520 = vpack.c.b16 %v476, %v475
        %v521 = vpack.c.b16 %v478, %v477
        %v522 = vpack.c.b16 %v480, %v479
        %v523 = vpack.c.b16 %v482, %v481
        %v524 = vpack.c.b16 %v484, %v483
        %v525 = vpack.c.b16 %v486, %v485
        %v526 = vpack.c.b16 %v488, %v487
        %v527 = vpack.c.b16 %v490, %v489
        %v528 = vpack.c.b16 %v492, %v491
        %v529 = vpack.c.b16 %v494, %v493
        %v530 = vpack.c.b16 %v496, %v495
        %v531 = vpack.c.b16 %v498, %v497
        %v532 = vpack.c.b16 %v500, %v499
        %v581 = vunpack.c.l.b16 %v345
        %v582 = vunpack.c.h.b16 %v345
        %v583 = vunpack.c.l.b16 %v346
        %v584 = vunpack.c.h.b16 %v346
        %v585 = vunpack.c.l.b16 %v347
        %v586 = vunpack.c.h.b16 %v347
        %v587 = vunpack.c.l.b16 %v348
        %v588 = vunpack.c.h.b16 %v348
        %v589 = vunpack.c.l.b16 %v349
        %v590 = vunpack.c.h.b16 %v349
        %v591 = vunpack.c.l.b16 %v350
        %v592 = vunpack.c.h.b16 %v350
        %v593 = vunpack.c.l.b16 %v351
        %v594 = vunpack.c.h.b16 %v351
        %v595 = vunpack.c.l.b16 %v352
        %v596 = vunpack.c.h.b16 %v352
        %v597 = vunpack.c.l.b16 %v353
        %v598 = vunpack.c.h.b16 %v353
        %v599 = vunpack.c.l.b16 %v354
        %v600 = vunpack.c.h.b16 %v354
        %v601 = vunpack.c.l.b16 %v355
        %v602 = vunpack.c.h.b16 %v355
        %v603 = vunpack.c.l.b16 %v356
        %v604 = vunpack.c.h.b16 %v356
        %v605 = vunpack.c.l.b16 %v357
        %v606 = vunpack.c.h.b16 %v357
        %v607 = vunpack.c.l.b16 %v358
        %v608 = vunpack.c.h.b16 %v358
        %v609 = vunpack.c.l.b16 %v359
        %v610 = vunpack.c.h.b16 %v359
        %v611 = vunpack.c.l.b16 %v360
        %v612 = vunpack.c.h.b16 %v360
        %v613 = vpack.c.b16 %v583, %v581
        %v614 = vpack.c.b16 %v584, %v582
        %v615 = vpack.c.b16 %v587, %v585
        %v616 = vpack.c.b16 %v588, %v586
        %v617 = vpack.c.b16 %v591, %v589
        %v618 = vpack.c.b16 %v592, %v590
        %v619 = vpack.c.b16 %v595, %v593
        %v620 = vpack.c.b16 %v596, %v594
        %v621 = vpack.c.b16 %v599, %v597
        %v622 = vpack.c.b16 %v600, %v598
        %v623 = vpack.c.b16 %v603, %v601
        %v624 = vpack.c.b16 %v604, %v602
        %v625 = vpack.c.b16 %v607, %v605
        %v626 = vpack.c.b16 %v608, %v606
        %v627 = vpack.c.b16 %v611, %v609
        %v628 = vpack.c.b16 %v612, %v610
        %645 = vmatprep.subr.bf16.mxu0 %v628
        %646 = vmatpush1.bf16.msra.mxu0 %v627
        %647 = vmatprep.subr.bf16.mxu0 %v626
        %648 = vmatpush1.bf16.msra.mxu0 %v625
        %649 = vmatprep.subr.bf16.mxu0 %v624
        %650 = vmatpush1.bf16.msra.mxu0 %v623
        %651 = vmatprep.subr.bf16.mxu0 %v622
        %652 = vmatpush1.bf16.msra.mxu0 %v621
        %653 = vmatprep.subr.bf16.mxu0 %v620
        %654 = vmatpush1.bf16.msra.mxu0 %v619
        %655 = vmatprep.subr.bf16.mxu0 %v618
        %656 = vmatpush1.bf16.msra.mxu0 %v617
        %657 = vmatprep.subr.bf16.mxu0 %v616
        %658 = vmatpush1.bf16.msra.mxu0 %v615
        %659 = vmatprep.subr.bf16.mxu0 %v614
        %660 = vmatpush1.bf16.msra.mxu0 %v613
        %661 = vmatprep.subr.bf16.mxu0 0
        %662 = vmatpush2.bf16.msra.mxu0 0
        %663 = vmatprep.subr.bf16.mxu0 0
        %664 = vmatpush2.bf16.msra.mxu0 0
        %665 = vmatprep.subr.bf16.mxu0 0
        %666 = vmatpush2.bf16.msra.mxu0 0
        %667 = vmatprep.subr.bf16.mxu0 0
        %668 = vmatpush2.bf16.msra.mxu0 0
        %669 = vmatprep.subr.bf16.mxu0 0
        %670 = vmatpush2.bf16.msra.mxu0 0
        %671 = vmatprep.subr.bf16.mxu0 0
        %672 = vmatpush2.bf16.msra.mxu0 0
        %673 = vmatprep.subr.bf16.mxu0 0
        %674 = vmatpush2.bf16.msra.mxu0 0
        %675 = vmatprep.subr.bf16.mxu0 0
        %676 = vmatpush2.bf16.msra.mxu0 0
        %677 = vmatprep.mubr.bf16.mxu0 0
        %678 = vmatmul.mubr.bf16.gmra.mxu0 %v501
        %v679 = vpop.f32.mrf.mxu0
        %v680 = vadd.f32 %v366, %v679
        %v681 = vpop.f32.mrf.mxu0
        %v682 = vadd.f32 %v370, %v681
        %v683 = vpop.f32.mrf.mxu0
        %v684 = vadd.f32 %v366, %v683
        %v685 = vpop.f32.mrf.mxu0
        %v686 = vadd.f32 %v370, %v685
        %687 = vmatprep.mubr.bf16.mxu0 0
        %688 = vmatmul.mubr.bf16.gmra.mxu0 %v502
        %v689 = vpop.f32.mrf.mxu0
        %v690 = vadd.f32 %v366, %v689
        %v691 = vpop.f32.mrf.mxu0
        %v692 = vadd.f32 %v370, %v691
        %v693 = vpop.f32.mrf.mxu0
        %v694 = vadd.f32 %v366, %v693
        %v695 = vpop.f32.mrf.mxu0
        %v696 = vadd.f32 %v370, %v695
        %697 = vmatprep.mubr.bf16.mxu0 0
        %698 = vmatmul.mubr.bf16.gmra.mxu0 %v503
        %v699 = vpop.f32.mrf.mxu0
        %v700 = vadd.f32 %v366, %v699
        %v701 = vpop.f32.mrf.mxu0
        %v702 = vadd.f32 %v370, %v701
        %v703 = vpop.f32.mrf.mxu0
        %v704 = vadd.f32 %v366, %v703
        %v705 = vpop.f32.mrf.mxu0
        %v706 = vadd.f32 %v370, %v705
        %707 = vmatprep.mubr.bf16.mxu0 0
        %708 = vmatmul.mubr.bf16.gmra.mxu0 %v504
        %v709 = vpop.f32.mrf.mxu0
        %v710 = vadd.f32 %v366, %v709
        %v711 = vpop.f32.mrf.mxu0
        %v712 = vadd.f32 %v370, %v711
        %v713 = vpop.f32.mrf.mxu0
        %v714 = vadd.f32 %v366, %v713
        %v715 = vpop.f32.mrf.mxu0
        %v716 = vadd.f32 %v370, %v715
        %717 = vmatprep.mubr.bf16.mxu0 0
        %718 = vmatmul.mubr.bf16.gmra.mxu0 %v505
        %v719 = vpop.f32.mrf.mxu0
        %v720 = vadd.f32 %v366, %v719
        %v721 = vpop.f32.mrf.mxu0
        %v722 = vadd.f32 %v370, %v721
        %v723 = vpop.f32.mrf.mxu0
        %v724 = vadd.f32 %v366, %v723
        %v725 = vpop.f32.mrf.mxu0
        %v726 = vadd.f32 %v370, %v725
        %727 = vmatprep.mubr.bf16.mxu0 0
        %728 = vmatmul.mubr.bf16.gmra.mxu0 %v506
        %v729 = vpop.f32.mrf.mxu0
        %v730 = vadd.f32 %v366, %v729
        %v731 = vpop.f32.mrf.mxu0
        %v732 = vadd.f32 %v370, %v731
        %v733 = vpop.f32.mrf.mxu0
        %v734 = vadd.f32 %v366, %v733
        %v735 = vpop.f32.mrf.mxu0
        %v736 = vadd.f32 %v370, %v735
        %737 = vmatprep.mubr.bf16.mxu0 0
        %738 = vmatmul.mubr.bf16.gmra.mxu0 %v507
        %v739 = vpop.f32.mrf.mxu0
        %v740 = vadd.f32 %v366, %v739
        %v741 = vpop.f32.mrf.mxu0
        %v742 = vadd.f32 %v370, %v741
        %v743 = vpop.f32.mrf.mxu0
        %v744 = vadd.f32 %v366, %v743
        %v745 = vpop.f32.mrf.mxu0
        %v746 = vadd.f32 %v370, %v745
        %747 = vmatprep.mubr.bf16.mxu0 0
        %748 = vmatmul.mubr.bf16.gmra.mxu0 %v508
        %v749 = vpop.f32.mrf.mxu0
        %v750 = vadd.f32 %v366, %v749
        %v751 = vpop.f32.mrf.mxu0
        %v752 = vadd.f32 %v370, %v751
        %v753 = vpop.f32.mrf.mxu0
        %v754 = vadd.f32 %v366, %v753
        %v755 = vpop.f32.mrf.mxu0
        %v756 = vadd.f32 %v370, %v755
        %757 = vmatprep.mubr.bf16.mxu0 0
        %758 = vmatmul.mubr.bf16.gmra.mxu0 %v509
        %v759 = vpop.f32.mrf.mxu0
        %v760 = vadd.f32 %v366, %v759
        %v761 = vpop.f32.mrf.mxu0
        %v762 = vadd.f32 %v370, %v761
        %v763 = vpop.f32.mrf.mxu0
        %v764 = vadd.f32 %v366, %v763
        %v765 = vpop.f32.mrf.mxu0
        %v766 = vadd.f32 %v370, %v765
        %767 = vmatprep.mubr.bf16.mxu0 0
        %768 = vmatmul.mubr.bf16.gmra.mxu0 %v510
        %v769 = vpop.f32.mrf.mxu0
        %v770 = vadd.f32 %v366, %v769
        %v771 = vpop.f32.mrf.mxu0
        %v772 = vadd.f32 %v370, %v771
        %v773 = vpop.f32.mrf.mxu0
        %v774 = vadd.f32 %v366, %v773
        %v775 = vpop.f32.mrf.mxu0
        %v776 = vadd.f32 %v370, %v775
        %777 = vmatprep.mubr.bf16.mxu0 0
        %778 = vmatmul.mubr.bf16.gmra.mxu0 %v511
        %v779 = vpop.f32.mrf.mxu0
        %v780 = vadd.f32 %v366, %v779
        %v781 = vpop.f32.mrf.mxu0
        %v782 = vadd.f32 %v370, %v781
        %v783 = vpop.f32.mrf.mxu0
        %v784 = vadd.f32 %v366, %v783
        %v785 = vpop.f32.mrf.mxu0
        %v786 = vadd.f32 %v370, %v785
        %787 = vmatprep.mubr.bf16.mxu0 0
        %788 = vmatmul.mubr.bf16.gmra.mxu0 %v512
        %v789 = vpop.f32.mrf.mxu0
        %v790 = vadd.f32 %v366, %v789
        %v791 = vpop.f32.mrf.mxu0
        %v792 = vadd.f32 %v370, %v791
        %v793 = vpop.f32.mrf.mxu0
        %v794 = vadd.f32 %v366, %v793
        %v795 = vpop.f32.mrf.mxu0
        %v796 = vadd.f32 %v370, %v795
        %797 = vmatprep.mubr.bf16.mxu0 0
        %798 = vmatmul.mubr.bf16.gmra.mxu0 %v513
        %v799 = vpop.f32.mrf.mxu0
        %v800 = vadd.f32 %v366, %v799
        %v801 = vpop.f32.mrf.mxu0
        %v802 = vadd.f32 %v370, %v801
        %v803 = vpop.f32.mrf.mxu0
        %v804 = vadd.f32 %v366, %v803
        %v805 = vpop.f32.mrf.mxu0
        %v806 = vadd.f32 %v370, %v805
        %807 = vmatprep.mubr.bf16.mxu0 0
        %808 = vmatmul.mubr.bf16.gmra.mxu0 %v514
        %v809 = vpop.f32.mrf.mxu0
        %v810 = vadd.f32 %v366, %v809
        %v811 = vpop.f32.mrf.mxu0
        %v812 = vadd.f32 %v370, %v811
        %v813 = vpop.f32.mrf.mxu0
        %v814 = vadd.f32 %v366, %v813
        %v815 = vpop.f32.mrf.mxu0
        %v816 = vadd.f32 %v370, %v815
        %817 = vmatprep.mubr.bf16.mxu0 0
        %818 = vmatmul.mubr.bf16.gmra.mxu0 %v515
        %v819 = vpop.f32.mrf.mxu0
        %v820 = vadd.f32 %v366, %v819
        %v821 = vpop.f32.mrf.mxu0
        %v822 = vadd.f32 %v370, %v821
        %v823 = vpop.f32.mrf.mxu0
        %v824 = vadd.f32 %v366, %v823
        %v825 = vpop.f32.mrf.mxu0
        %v826 = vadd.f32 %v370, %v825
        %827 = vmatprep.mubr.bf16.mxu0 0
        %828 = vmatmul.mubr.bf16.gmra.mxu0 %v516
        %v829 = vpop.f32.mrf.mxu0
        %v830 = vadd.f32 %v366, %v829
        %v831 = vpop.f32.mrf.mxu0
        %v832 = vadd.f32 %v370, %v831
        %v833 = vpop.f32.mrf.mxu0
        %v834 = vadd.f32 %v366, %v833
        %v835 = vpop.f32.mrf.mxu0
        %v836 = vadd.f32 %v370, %v835
        %837 = vmatprep.mubr.bf16.mxu0 0
        %838 = vmatmul.mubr.bf16.gmra.mxu0 %v517
        %v839 = vpop.f32.mrf.mxu0
        %v840 = vadd.f32 %v366, %v839
        %v841 = vpop.f32.mrf.mxu0
        %v842 = vadd.f32 %v370, %v841
        %v843 = vpop.f32.mrf.mxu0
        %v844 = vadd.f32 %v366, %v843
        %v845 = vpop.f32.mrf.mxu0
        %v846 = vadd.f32 %v370, %v845
        %847 = vmatprep.mubr.bf16.mxu0 0
        %848 = vmatmul.mubr.bf16.gmra.mxu0 %v518
        %v849 = vpop.f32.mrf.mxu0
        %v850 = vadd.f32 %v366, %v849
        %v851 = vpop.f32.mrf.mxu0
        %v852 = vadd.f32 %v370, %v851
        %v853 = vpop.f32.mrf.mxu0
        %v854 = vadd.f32 %v366, %v853
        %v855 = vpop.f32.mrf.mxu0
        %v856 = vadd.f32 %v370, %v855
        %857 = vmatprep.mubr.bf16.mxu0 0
        %858 = vmatmul.mubr.bf16.gmra.mxu0 %v519
        %v859 = vpop.f32.mrf.mxu0
        %v860 = vadd.f32 %v366, %v859
        %v861 = vpop.f32.mrf.mxu0
        %v862 = vadd.f32 %v370, %v861
        %v863 = vpop.f32.mrf.mxu0
        %v864 = vadd.f32 %v366, %v863
        %v865 = vpop.f32.mrf.mxu0
        %v866 = vadd.f32 %v370, %v865
        %867 = vmatprep.mubr.bf16.mxu0 0
        %868 = vmatmul.mubr.bf16.gmra.mxu0 %v520
        %v869 = vpop.f32.mrf.mxu0
        %v870 = vadd.f32 %v366, %v869
        %v871 = vpop.f32.mrf.mxu0
        %v872 = vadd.f32 %v370, %v871
        %v873 = vpop.f32.mrf.mxu0
        %v874 = vadd.f32 %v366, %v873
        %v875 = vpop.f32.mrf.mxu0
        %v876 = vadd.f32 %v370, %v875
        %877 = vmatprep.mubr.bf16.mxu0 0
        %878 = vmatmul.mubr.bf16.gmra.mxu0 %v521
        %v879 = vpop.f32.mrf.mxu0
        %v880 = vadd.f32 %v366, %v879
        %v881 = vpop.f32.mrf.mxu0
        %v882 = vadd.f32 %v370, %v881
        %v883 = vpop.f32.mrf.mxu0
        %v884 = vadd.f32 %v366, %v883
        %v885 = vpop.f32.mrf.mxu0
        %v886 = vadd.f32 %v370, %v885
        %887 = vmatprep.mubr.bf16.mxu0 0
        %888 = vmatmul.mubr.bf16.gmra.mxu0 %v522
        %v889 = vpop.f32.mrf.mxu0
        %v890 = vadd.f32 %v366, %v889
        %v891 = vpop.f32.mrf.mxu0
        %v892 = vadd.f32 %v370, %v891
        %v893 = vpop.f32.mrf.mxu0
        %v894 = vadd.f32 %v366, %v893
        %v895 = vpop.f32.mrf.mxu0
        %v896 = vadd.f32 %v370, %v895
        %897 = vmatprep.mubr.bf16.mxu0 0
        %898 = vmatmul.mubr.bf16.gmra.mxu0 %v523
        %v899 = vpop.f32.mrf.mxu0
        %v900 = vadd.f32 %v366, %v899
        %v901 = vpop.f32.mrf.mxu0
        %v902 = vadd.f32 %v370, %v901
        %v903 = vpop.f32.mrf.mxu0
        %v904 = vadd.f32 %v366, %v903
        %v905 = vpop.f32.mrf.mxu0
        %v906 = vadd.f32 %v370, %v905
        %907 = vmatprep.mubr.bf16.mxu0 0
        %908 = vmatmul.mubr.bf16.gmra.mxu0 %v524
        %v909 = vpop.f32.mrf.mxu0
        %v910 = vadd.f32 %v366, %v909
        %v911 = vpop.f32.mrf.mxu0
        %v912 = vadd.f32 %v370, %v911
        %v913 = vpop.f32.mrf.mxu0
        %v914 = vadd.f32 %v366, %v913
        %v915 = vpop.f32.mrf.mxu0
        %v916 = vadd.f32 %v370, %v915
        %917 = vmatprep.mubr.bf16.mxu0 0
        %918 = vmatmul.mubr.bf16.gmra.mxu0 %v525
        %v919 = vpop.f32.mrf.mxu0
        %v920 = vadd.f32 %v366, %v919
        %v921 = vpop.f32.mrf.mxu0
        %v922 = vadd.f32 %v370, %v921
        %v923 = vpop.f32.mrf.mxu0
        %v924 = vadd.f32 %v366, %v923
        %v925 = vpop.f32.mrf.mxu0
        %v926 = vadd.f32 %v370, %v925
        %927 = vmatprep.mubr.bf16.mxu0 0
        %928 = vmatmul.mubr.bf16.gmra.mxu0 %v526
        %v929 = vpop.f32.mrf.mxu0
        %v930 = vadd.f32 %v366, %v929
        %v931 = vpop.f32.mrf.mxu0
        %v932 = vadd.f32 %v370, %v931
        %v933 = vpop.f32.mrf.mxu0
        %v934 = vadd.f32 %v366, %v933
        %v935 = vpop.f32.mrf.mxu0
        %v936 = vadd.f32 %v370, %v935
        %937 = vmatprep.mubr.bf16.mxu0 0
        %938 = vmatmul.mubr.bf16.gmra.mxu0 %v527
        %v939 = vpop.f32.mrf.mxu0
        %v940 = vadd.f32 %v366, %v939
        %v941 = vpop.f32.mrf.mxu0
        %v942 = vadd.f32 %v370, %v941
        %v943 = vpop.f32.mrf.mxu0
        %v944 = vadd.f32 %v366, %v943
        %v945 = vpop.f32.mrf.mxu0
        %v946 = vadd.f32 %v370, %v945
        %947 = vmatprep.mubr.bf16.mxu0 0
        %948 = vmatmul.mubr.bf16.gmra.mxu0 %v528
        %v949 = vpop.f32.mrf.mxu0
        %v950 = vadd.f32 %v366, %v949
        %v951 = vpop.f32.mrf.mxu0
        %v952 = vadd.f32 %v370, %v951
        %v953 = vpop.f32.mrf.mxu0
        %v954 = vadd.f32 %v366, %v953
        %v955 = vpop.f32.mrf.mxu0
        %v956 = vadd.f32 %v370, %v955
        %957 = vmatprep.mubr.bf16.mxu0 0
        %958 = vmatmul.mubr.bf16.gmra.mxu0 %v529
        %v959 = vpop.f32.mrf.mxu0
        %v960 = vadd.f32 %v366, %v959
        %v961 = vpop.f32.mrf.mxu0
        %v962 = vadd.f32 %v370, %v961
        %v963 = vpop.f32.mrf.mxu0
        %v964 = vadd.f32 %v366, %v963
        %v965 = vpop.f32.mrf.mxu0
        %v966 = vadd.f32 %v370, %v965
        %967 = vmatprep.mubr.bf16.mxu0 0
        %968 = vmatmul.mubr.bf16.gmra.mxu0 %v530
        %v969 = vpop.f32.mrf.mxu0
        %v970 = vadd.f32 %v366, %v969
        %v971 = vpop.f32.mrf.mxu0
        %v972 = vadd.f32 %v370, %v971
        %v973 = vpop.f32.mrf.mxu0
        %v974 = vadd.f32 %v366, %v973
        %v975 = vpop.f32.mrf.mxu0
        %v976 = vadd.f32 %v370, %v975
        %977 = vmatprep.mubr.bf16.mxu0 0
        %978 = vmatmul.mubr.bf16.gmra.mxu0 %v531
        %v979 = vpop.f32.mrf.mxu0
        %v980 = vadd.f32 %v366, %v979
        %v981 = vpop.f32.mrf.mxu0
        %v982 = vadd.f32 %v370, %v981
        %v983 = vpop.f32.mrf.mxu0
        %v984 = vadd.f32 %v366, %v983
        %v985 = vpop.f32.mrf.mxu0
        %v986 = vadd.f32 %v370, %v985
        %987 = vmatprep.mubr.bf16.mxu0 0
        %988 = vmatmul.mubr.bf16.gmra.mxu0 %v532
        %v989 = vpop.f32.mrf.mxu0
        %v990 = vadd.f32 %v366, %v989
        %v991 = vpop.f32.mrf.mxu0
        %v992 = vadd.f32 %v370, %v991
        %v993 = vpop.f32.mrf.mxu0
        %v994 = vadd.f32 %v366, %v993
        %v995 = vpop.f32.mrf.mxu0
        %v996 = vadd.f32 %v370, %v995
        %997 = vdwg.mxu0
        %v998 = vmax.f32 %v682, 0.0
        %v999 = vmax.f32 %v686, 0.0
        %v1000 = vmax.f32 %v692, 0.0
        %v1001 = vmax.f32 %v696, 0.0
        %v1002 = vmax.f32 %v702, 0.0
        %v1003 = vmax.f32 %v706, 0.0
        %v1004 = vmax.f32 %v712, 0.0
        %v1005 = vmax.f32 %v716, 0.0
        %v1006 = vmax.f32 %v722, 0.0
        %v1007 = vmax.f32 %v726, 0.0
        %v1008 = vmax.f32 %v732, 0.0
        %v1009 = vmax.f32 %v736, 0.0
        %v1010 = vmax.f32 %v742, 0.0
        %v1011 = vmax.f32 %v746, 0.0
        %v1012 = vmax.f32 %v752, 0.0
        %v1013 = vmax.f32 %v756, 0.0
        %v1014 = vmax.f32 %v762, 0.0
        %v1015 = vmax.f32 %v766, 0.0
        %v1016 = vmax.f32 %v772, 0.0
        %v1017 = vmax.f32 %v776, 0.0
        %v1018 = vmax.f32 %v782, 0.0
        %v1019 = vmax.f32 %v786, 0.0
        %v1020 = vmax.f32 %v792, 0.0
        %v1021 = vmax.f32 %v796, 0.0
        %v1022 = vmax.f32 %v802, 0.0
        %v1023 = vmax.f32 %v806, 0.0
        %v1024 = vmax.f32 %v812, 0.0
        %v1025 = vmax.f32 %v816, 0.0
        %v1026 = vmax.f32 %v822, 0.0
        %v1027 = vmax.f32 %v826, 0.0
        %v1028 = vmax.f32 %v832, 0.0
        %v1029 = vmax.f32 %v836, 0.0
        %v1030 = vand.u32 2147483647, %v682
        %v1031 = vand.u32 2147483647, %v686
        %v1032 = vand.u32 2147483647, %v692
        %v1033 = vand.u32 2147483647, %v696
        %v1034 = vand.u32 2147483647, %v702
        %v1035 = vand.u32 2147483647, %v706
        %v1036 = vand.u32 2147483647, %v712
        %v1037 = vand.u32 2147483647, %v716
        %v1038 = vand.u32 2147483647, %v722
        %v1039 = vand.u32 2147483647, %v726
        %v1040 = vand.u32 2147483647, %v732
        %v1041 = vand.u32 2147483647, %v736
        %v1042 = vand.u32 2147483647, %v742
        %v1043 = vand.u32 2147483647, %v746
        %v1044 = vand.u32 2147483647, %v752
        %v1045 = vand.u32 2147483647, %v756
        %v1046 = vand.u32 2147483647, %v762
        %v1047 = vand.u32 2147483647, %v766
        %v1048 = vand.u32 2147483647, %v772
        %v1049 = vand.u32 2147483647, %v776
        %v1050 = vand.u32 2147483647, %v782
        %v1051 = vand.u32 2147483647, %v786
        %v1052 = vand.u32 2147483647, %v792
        %v1053 = vand.u32 2147483647, %v796
        %v1054 = vand.u32 2147483647, %v802
        %v1055 = vand.u32 2147483647, %v806
        %v1056 = vand.u32 2147483647, %v812
        %v1057 = vand.u32 2147483647, %v816
        %v1058 = vand.u32 2147483647, %v822
        %v1059 = vand.u32 2147483647, %v826
        %v1060 = vand.u32 2147483647, %v832
        %v1061 = vand.u32 2147483647, %v836
        %v1062 = vsub.f32 0.0, %v1030
        %v1063 = vsub.f32 0.0, %v1031
        %v1064 = vsub.f32 0.0, %v1032
        %v1065 = vsub.f32 0.0, %v1033
        %v1066 = vsub.f32 0.0, %v1034
        %v1067 = vsub.f32 0.0, %v1035
        %v1068 = vsub.f32 0.0, %v1036
        %v1069 = vsub.f32 0.0, %v1037
        %v1070 = vsub.f32 0.0, %v1038
        %v1071 = vsub.f32 0.0, %v1039
        %v1072 = vsub.f32 0.0, %v1040
        %v1073 = vsub.f32 0.0, %v1041
        %v1074 = vsub.f32 0.0, %v1042
        %v1075 = vsub.f32 0.0, %v1043
        %v1076 = vsub.f32 0.0, %v1044
        %v1077 = vsub.f32 0.0, %v1045
        %v1078 = vsub.f32 0.0, %v1046
        %v1079 = vsub.f32 0.0, %v1047
        %v1080 = vsub.f32 0.0, %v1048
        %v1081 = vsub.f32 0.0, %v1049
        %v1082 = vsub.f32 0.0, %v1050
        %v1083 = vsub.f32 0.0, %v1051
        %v1084 = vsub.f32 0.0, %v1052
        %v1085 = vsub.f32 0.0, %v1053
        %v1086 = vsub.f32 0.0, %v1054
        %v1087 = vsub.f32 0.0, %v1055
        %v1088 = vsub.f32 0.0, %v1056
        %v1089 = vsub.f32 0.0, %v1057
        %v1090 = vsub.f32 0.0, %v1058
        %v1091 = vsub.f32 0.0, %v1059
        %v1092 = vsub.f32 0.0, %v1060
        %v1093 = vsub.f32 0.0, %v1061
        %v1094 = vmul.f32 %v1062, 1.442695
        %v1095 = vpow.pop %v1094
        %v1096 = vmul.f32 %v1063, 1.442695
        %v1097 = vpow.pop %v1096
        %v1098 = vmul.f32 %v1064, 1.442695
        %v1099 = vpow.pop %v1098
        %v1100 = vmul.f32 %v1065, 1.442695
        %v1101 = vpow.pop %v1100
        %v1102 = vmul.f32 %v1066, 1.442695
        %v1103 = vpow.pop %v1102
        %v1104 = vmul.f32 %v1067, 1.442695
        %v1105 = vpow.pop %v1104
        %v1106 = vmul.f32 %v1068, 1.442695
        %v1107 = vpow.pop %v1106
        %v1108 = vmul.f32 %v1069, 1.442695
        %v1109 = vpow.pop %v1108
        %v1110 = vmul.f32 %v1070, 1.442695
        %v1111 = vpow.pop %v1110
        %v1112 = vmul.f32 %v1071, 1.442695
        %v1113 = vpow.pop %v1112
        %v1114 = vmul.f32 %v1072, 1.442695
        %v1115 = vpow.pop %v1114
        %v1116 = vmul.f32 %v1073, 1.442695
        %v1117 = vpow.pop %v1116
        %v1118 = vmul.f32 %v1074, 1.442695
        %v1119 = vpow.pop %v1118
        %v1120 = vmul.f32 %v1075, 1.442695
        %v1121 = vpow.pop %v1120
        %v1122 = vmul.f32 %v1076, 1.442695
        %v1123 = vpow.pop %v1122
        %v1124 = vmul.f32 %v1077, 1.442695
        %v1125 = vpow.pop %v1124
        %v1126 = vmul.f32 %v1078, 1.442695
        %v1127 = vpow.pop %v1126
        %v1128 = vmul.f32 %v1079, 1.442695
        %v1129 = vpow.pop %v1128
        %v1130 = vmul.f32 %v1080, 1.442695
        %v1131 = vpow.pop %v1130
        %v1132 = vmul.f32 %v1081, 1.442695
        %v1133 = vpow.pop %v1132
        %v1134 = vmul.f32 %v1082, 1.442695
        %v1135 = vpow.pop %v1134
        %v1136 = vmul.f32 %v1083, 1.442695
        %v1137 = vpow.pop %v1136
        %v1138 = vmul.f32 %v1084, 1.442695
        %v1139 = vpow.pop %v1138
        %v1140 = vmul.f32 %v1085, 1.442695
        %v1141 = vpow.pop %v1140
        %v1142 = vmul.f32 %v1086, 1.442695
        %v1143 = vpow.pop %v1142
        %v1144 = vmul.f32 %v1087, 1.442695
        %v1145 = vpow.pop %v1144
        %v1146 = vmul.f32 %v1088, 1.442695
        %v1147 = vpow.pop %v1146
        %v1148 = vmul.f32 %v1089, 1.442695
        %v1149 = vpow.pop %v1148
        %v1150 = vmul.f32 %v1090, 1.442695
        %v1151 = vpow.pop %v1150
        %v1152 = vmul.f32 %v1091, 1.442695
        %v1153 = vpow.pop %v1152
        %v1154 = vmul.f32 %v1092, 1.442695
        %v1155 = vpow.pop %v1154
        %v1156 = vmul.f32 %v1093, 1.442695
        %v1157 = vpow.pop %v1156
        %v1158 = vadd.f32 %v1095, 1.0
        %v1159 = vadd.f32 %v1097, 1.0
        %v1160 = vadd.f32 %v1099, 1.0
        %v1161 = vadd.f32 %v1101, 1.0
        %v1162 = vadd.f32 %v1103, 1.0
        %v1163 = vadd.f32 %v1105, 1.0
        %v1164 = vadd.f32 %v1107, 1.0
        %v1165 = vadd.f32 %v1109, 1.0
        %v1166 = vadd.f32 %v1111, 1.0
        %v1167 = vadd.f32 %v1113, 1.0
        %v1168 = vadd.f32 %v1115, 1.0
        %v1169 = vadd.f32 %v1117, 1.0
        %v1170 = vadd.f32 %v1119, 1.0
        %v1171 = vadd.f32 %v1121, 1.0
        %v1172 = vadd.f32 %v1123, 1.0
        %v1173 = vadd.f32 %v1125, 1.0
        %v1174 = vadd.f32 %v1127, 1.0
        %v1175 = vadd.f32 %v1129, 1.0
        %v1176 = vadd.f32 %v1131, 1.0
        %v1177 = vadd.f32 %v1133, 1.0
        %v1178 = vadd.f32 %v1135, 1.0
        %v1179 = vadd.f32 %v1137, 1.0
        %v1180 = vadd.f32 %v1139, 1.0
        %v1181 = vadd.f32 %v1141, 1.0
        %v1182 = vadd.f32 %v1143, 1.0
        %v1183 = vadd.f32 %v1145, 1.0
        %v1184 = vadd.f32 %v1147, 1.0
        %v1185 = vadd.f32 %v1149, 1.0
        %v1186 = vadd.f32 %v1151, 1.0
        %v1187 = vadd.f32 %v1153, 1.0
        %v1188 = vadd.f32 %v1155, 1.0
        %v1189 = vadd.f32 %v1157, 1.0
        %v1190 = vlog2.pop %v1158
        %v1191 = vmul.f32 %v1190, 0.6931472
        %v1192 = vlog2.pop %v1159
        %v1193 = vmul.f32 %v1192, 0.6931472
        %v1194 = vlog2.pop %v1160
        %v1195 = vmul.f32 %v1194, 0.6931472
        %v1196 = vlog2.pop %v1161
        %v1197 = vmul.f32 %v1196, 0.6931472
        %v1198 = vlog2.pop %v1162
        %v1199 = vmul.f32 %v1198, 0.6931472
        %v1200 = vlog2.pop %v1163
        %v1201 = vmul.f32 %v1200, 0.6931472
        %v1202 = vlog2.pop %v1164
        %v1203 = vmul.f32 %v1202, 0.6931472
        %v1204 = vlog2.pop %v1165
        %v1205 = vmul.f32 %v1204, 0.6931472
        %v1206 = vlog2.pop %v1166
        %v1207 = vmul.f32 %v1206, 0.6931472
        %v1208 = vlog2.pop %v1167
        %v1209 = vmul.f32 %v1208, 0.6931472
        %v1210 = vlog2.pop %v1168
        %v1211 = vmul.f32 %v1210, 0.6931472
        %v1212 = vlog2.pop %v1169
        %v1213 = vmul.f32 %v1212, 0.6931472
        %v1214 = vlog2.pop %v1170
        %v1215 = vmul.f32 %v1214, 0.6931472
        %v1216 = vlog2.pop %v1171
        %v1217 = vmul.f32 %v1216, 0.6931472
        %v1218 = vlog2.pop %v1172
        %v1219 = vmul.f32 %v1218, 0.6931472
        %v1220 = vlog2.pop %v1173
        %v1221 = vmul.f32 %v1220, 0.6931472
        %v1222 = vlog2.pop %v1174
        %v1223 = vmul.f32 %v1222, 0.6931472
        %v1224 = vlog2.pop %v1175
        %v1225 = vmul.f32 %v1224, 0.6931472
        %v1226 = vlog2.pop %v1176
        %v1227 = vmul.f32 %v1226, 0.6931472
        %v1228 = vlog2.pop %v1177
        %v1229 = vmul.f32 %v1228, 0.6931472
        %v1230 = vlog2.pop %v1178
        %v1231 = vmul.f32 %v1230, 0.6931472
        %v1232 = vlog2.pop %v1179
        %v1233 = vmul.f32 %v1232, 0.6931472
        %v1234 = vlog2.pop %v1180
        %v1235 = vmul.f32 %v1234, 0.6931472
        %v1236 = vlog2.pop %v1181
        %v1237 = vmul.f32 %v1236, 0.6931472
        %v1238 = vlog2.pop %v1182
        %v1239 = vmul.f32 %v1238, 0.6931472
        %v1240 = vlog2.pop %v1183
        %v1241 = vmul.f32 %v1240, 0.6931472
        %v1242 = vlog2.pop %v1184
        %v1243 = vmul.f32 %v1242, 0.6931472
        %v1244 = vlog2.pop %v1185
        %v1245 = vmul.f32 %v1244, 0.6931472
        %v1246 = vlog2.pop %v1186
        %v1247 = vmul.f32 %v1246, 0.6931472
        %v1248 = vlog2.pop %v1187
        %v1249 = vmul.f32 %v1248, 0.6931472
        %v1250 = vlog2.pop %v1188
        %v1251 = vmul.f32 %v1250, 0.6931472
        %v1252 = vlog2.pop %v1189
        %v1253 = vmul.f32 %v1252, 0.6931472
        %v1254 = vadd.f32 %v998, %v1191
        %v1255 = vadd.f32 %v999, %v1193
        %v1256 = vadd.f32 %v1000, %v1195
        %v1257 = vadd.f32 %v1001, %v1197
        %v1258 = vadd.f32 %v1002, %v1199
        %v1259 = vadd.f32 %v1003, %v1201
        %v1260 = vadd.f32 %v1004, %v1203
        %v1261 = vadd.f32 %v1005, %v1205
        %v1262 = vadd.f32 %v1006, %v1207
        %v1263 = vadd.f32 %v1007, %v1209
        %v1264 = vadd.f32 %v1008, %v1211
        %v1265 = vadd.f32 %v1009, %v1213
        %v1266 = vadd.f32 %v1010, %v1215
        %v1267 = vadd.f32 %v1011, %v1217
        %v1268 = vadd.f32 %v1012, %v1219
        %v1269 = vadd.f32 %v1013, %v1221
        %v1270 = vadd.f32 %v1014, %v1223
        %v1271 = vadd.f32 %v1015, %v1225
        %v1272 = vadd.f32 %v1016, %v1227
        %v1273 = vadd.f32 %v1017, %v1229
        %v1274 = vadd.f32 %v1018, %v1231
        %v1275 = vadd.f32 %v1019, %v1233
        %v1276 = vadd.f32 %v1020, %v1235
        %v1277 = vadd.f32 %v1021, %v1237
        %v1278 = vadd.f32 %v1022, %v1239
        %v1279 = vadd.f32 %v1023, %v1241
        %v1280 = vadd.f32 %v1024, %v1243
        %v1281 = vadd.f32 %v1025, %v1245
        %v1282 = vadd.f32 %v1026, %v1247
        %v1283 = vadd.f32 %v1027, %v1249
        %v1284 = vadd.f32 %v1028, %v1251
        %v1285 = vadd.f32 %v1029, %v1253
        %v1286 = vmul.f32 %v1254, 0.9
        %v1287 = vmul.f32 %v1255, 0.9
        %v1288 = vmul.f32 %v1256, 0.9
        %v1289 = vmul.f32 %v1257, 0.9
        %v1290 = vmul.f32 %v1258, 0.9
        %v1291 = vmul.f32 %v1259, 0.9
        %v1292 = vmul.f32 %v1260, 0.9
        %v1293 = vmul.f32 %v1261, 0.9
        %v1294 = vmul.f32 %v1262, 0.9
        %v1295 = vmul.f32 %v1263, 0.9
        %v1296 = vmul.f32 %v1264, 0.9
        %v1297 = vmul.f32 %v1265, 0.9
        %v1298 = vmul.f32 %v1266, 0.9
        %v1299 = vmul.f32 %v1267, 0.9
        %v1300 = vmul.f32 %v1268, 0.9
        %v1301 = vmul.f32 %v1269, 0.9
        %v1302 = vmul.f32 %v1270, 0.9
        %v1303 = vmul.f32 %v1271, 0.9
        %v1304 = vmul.f32 %v1272, 0.9
        %v1305 = vmul.f32 %v1273, 0.9
        %v1306 = vmul.f32 %v1274, 0.9
        %v1307 = vmul.f32 %v1275, 0.9
        %v1308 = vmul.f32 %v1276, 0.9
        %v1309 = vmul.f32 %v1277, 0.9
        %v1310 = vmul.f32 %v1278, 0.9
        %v1311 = vmul.f32 %v1279, 0.9
        %v1312 = vmul.f32 %v1280, 0.9
        %v1313 = vmul.f32 %v1281, 0.9
        %v1314 = vmul.f32 %v1282, 0.9
        %v1315 = vmul.f32 %v1283, 0.9
        %v1316 = vmul.f32 %v1284, 0.9
        %v1317 = vmul.f32 %v1285, 0.9
        %v1318 = vadd.f32 %v1286, 0.1
        %v1319 = vadd.f32 %v1287, 0.1
        %v1320 = vadd.f32 %v1288, 0.1
        %v1321 = vadd.f32 %v1289, 0.1
        %v1322 = vadd.f32 %v1290, 0.1
        %v1323 = vadd.f32 %v1291, 0.1
        %v1324 = vadd.f32 %v1292, 0.1
        %v1325 = vadd.f32 %v1293, 0.1
        %v1326 = vadd.f32 %v1294, 0.1
        %v1327 = vadd.f32 %v1295, 0.1
        %v1328 = vadd.f32 %v1296, 0.1
        %v1329 = vadd.f32 %v1297, 0.1
        %v1330 = vadd.f32 %v1298, 0.1
        %v1331 = vadd.f32 %v1299, 0.1
        %v1332 = vadd.f32 %v1300, 0.1
        %v1333 = vadd.f32 %v1301, 0.1
        %v1334 = vadd.f32 %v1302, 0.1
        %v1335 = vadd.f32 %v1303, 0.1
        %v1336 = vadd.f32 %v1304, 0.1
        %v1337 = vadd.f32 %v1305, 0.1
        %v1338 = vadd.f32 %v1306, 0.1
        %v1339 = vadd.f32 %v1307, 0.1
        %v1340 = vadd.f32 %v1308, 0.1
        %v1341 = vadd.f32 %v1309, 0.1
        %v1342 = vadd.f32 %v1310, 0.1
        %v1343 = vadd.f32 %v1311, 0.1
        %v1344 = vadd.f32 %v1312, 0.1
        %v1345 = vadd.f32 %v1313, 0.1
        %v1346 = vadd.f32 %v1314, 0.1
        %v1347 = vadd.f32 %v1315, 0.1
        %v1348 = vadd.f32 %v1316, 0.1
        %v1349 = vadd.f32 %v1317, 0.1
        %v1350 = vmax.f32 %v842, 0.0
        %v1351 = vmax.f32 %v846, 0.0
        %v1352 = vmax.f32 %v852, 0.0
        %v1353 = vmax.f32 %v856, 0.0
        %v1354 = vmax.f32 %v862, 0.0
        %v1355 = vmax.f32 %v866, 0.0
        %v1356 = vmax.f32 %v872, 0.0
        %v1357 = vmax.f32 %v876, 0.0
        %v1358 = vmax.f32 %v882, 0.0
        %v1359 = vmax.f32 %v886, 0.0
        %v1360 = vmax.f32 %v892, 0.0
        %v1361 = vmax.f32 %v896, 0.0
        %v1362 = vmax.f32 %v902, 0.0
        %v1363 = vmax.f32 %v906, 0.0
        %v1364 = vmax.f32 %v912, 0.0
        %v1365 = vmax.f32 %v916, 0.0
        %v1366 = vmax.f32 %v922, 0.0
        %v1367 = vmax.f32 %v926, 0.0
        %v1368 = vmax.f32 %v932, 0.0
        %v1369 = vmax.f32 %v936, 0.0
        %v1370 = vmax.f32 %v942, 0.0
        %v1371 = vmax.f32 %v946, 0.0
        %v1372 = vmax.f32 %v952, 0.0
        %v1373 = vmax.f32 %v956, 0.0
        %v1374 = vmax.f32 %v962, 0.0
        %v1375 = vmax.f32 %v966, 0.0
        %v1376 = vmax.f32 %v972, 0.0
        %v1377 = vmax.f32 %v976, 0.0
        %v1378 = vmax.f32 %v982, 0.0
        %v1379 = vmax.f32 %v986, 0.0
        %v1380 = vmax.f32 %v992, 0.0
        %v1381 = vmax.f32 %v996, 0.0
        %v1382 = vand.u32 2147483647, %v842
        %v1383 = vand.u32 2147483647, %v846
        %v1384 = vand.u32 2147483647, %v852
        %v1385 = vand.u32 2147483647, %v856
        %v1386 = vand.u32 2147483647, %v862
        %v1387 = vand.u32 2147483647, %v866
        %v1388 = vand.u32 2147483647, %v872
        %v1389 = vand.u32 2147483647, %v876
        %v1390 = vand.u32 2147483647, %v882
        %v1391 = vand.u32 2147483647, %v886
        %v1392 = vand.u32 2147483647, %v892
        %v1393 = vand.u32 2147483647, %v896
        %v1394 = vand.u32 2147483647, %v902
        %v1395 = vand.u32 2147483647, %v906
        %v1396 = vand.u32 2147483647, %v912
        %v1397 = vand.u32 2147483647, %v916
        %v1398 = vand.u32 2147483647, %v922
        %v1399 = vand.u32 2147483647, %v926
        %v1400 = vand.u32 2147483647, %v932
        %v1401 = vand.u32 2147483647, %v936
        %v1402 = vand.u32 2147483647, %v942
        %v1403 = vand.u32 2147483647, %v946
        %v1404 = vand.u32 2147483647, %v952
        %v1405 = vand.u32 2147483647, %v956
        %v1406 = vand.u32 2147483647, %v962
        %v1407 = vand.u32 2147483647, %v966
        %v1408 = vand.u32 2147483647, %v972
        %v1409 = vand.u32 2147483647, %v976
        %v1410 = vand.u32 2147483647, %v982
        %v1411 = vand.u32 2147483647, %v986
        %v1412 = vand.u32 2147483647, %v992
        %v1413 = vand.u32 2147483647, %v996
        %v1414 = vsub.f32 0.0, %v1382
        %v1415 = vsub.f32 0.0, %v1383
        %v1416 = vsub.f32 0.0, %v1384
        %v1417 = vsub.f32 0.0, %v1385
        %v1418 = vsub.f32 0.0, %v1386
        %v1419 = vsub.f32 0.0, %v1387
        %v1420 = vsub.f32 0.0, %v1388
        %v1421 = vsub.f32 0.0, %v1389
        %v1422 = vsub.f32 0.0, %v1390
        %v1423 = vsub.f32 0.0, %v1391
        %v1424 = vsub.f32 0.0, %v1392
        %v1425 = vsub.f32 0.0, %v1393
        %v1426 = vsub.f32 0.0, %v1394
        %v1427 = vsub.f32 0.0, %v1395
        %v1428 = vsub.f32 0.0, %v1396
        %v1429 = vsub.f32 0.0, %v1397
        %v1430 = vsub.f32 0.0, %v1398
        %v1431 = vsub.f32 0.0, %v1399
        %v1432 = vsub.f32 0.0, %v1400
        %v1433 = vsub.f32 0.0, %v1401
        %v1434 = vsub.f32 0.0, %v1402
        %v1435 = vsub.f32 0.0, %v1403
        %v1436 = vsub.f32 0.0, %v1404
        %v1437 = vsub.f32 0.0, %v1405
        %v1438 = vsub.f32 0.0, %v1406
        %v1439 = vsub.f32 0.0, %v1407
        %v1440 = vsub.f32 0.0, %v1408
        %v1441 = vsub.f32 0.0, %v1409
        %v1442 = vsub.f32 0.0, %v1410
        %v1443 = vsub.f32 0.0, %v1411
        %v1444 = vsub.f32 0.0, %v1412
        %v1445 = vsub.f32 0.0, %v1413
        %v1446 = vmul.f32 %v1414, 1.442695
        %v1447 = vpow.pop %v1446
        %v1448 = vmul.f32 %v1415, 1.442695
        %v1449 = vpow.pop %v1448
        %v1450 = vmul.f32 %v1416, 1.442695
        %v1451 = vpow.pop %v1450
        %v1452 = vmul.f32 %v1417, 1.442695
        %v1453 = vpow.pop %v1452
        %v1454 = vmul.f32 %v1418, 1.442695
        %v1455 = vpow.pop %v1454
        %v1456 = vmul.f32 %v1419, 1.442695
        %v1457 = vpow.pop %v1456
        %v1458 = vmul.f32 %v1420, 1.442695
        %v1459 = vpow.pop %v1458
        %v1460 = vmul.f32 %v1421, 1.442695
        %v1461 = vpow.pop %v1460
        %v1462 = vmul.f32 %v1422, 1.442695
        %v1463 = vpow.pop %v1462
        %v1464 = vmul.f32 %v1423, 1.442695
        %v1465 = vpow.pop %v1464
        %v1466 = vmul.f32 %v1424, 1.442695
        %v1467 = vpow.pop %v1466
        %v1468 = vmul.f32 %v1425, 1.442695
        %v1469 = vpow.pop %v1468
        %v1470 = vmul.f32 %v1426, 1.442695
        %v1471 = vpow.pop %v1470
        %v1472 = vmul.f32 %v1427, 1.442695
        %v1473 = vpow.pop %v1472
        %v1474 = vmul.f32 %v1428, 1.442695
        %v1475 = vpow.pop %v1474
        %v1476 = vmul.f32 %v1429, 1.442695
        %v1477 = vpow.pop %v1476
        %v1478 = vmul.f32 %v1430, 1.442695
        %v1479 = vpow.pop %v1478
        %v1480 = vmul.f32 %v1431, 1.442695
        %v1481 = vpow.pop %v1480
        %v1482 = vmul.f32 %v1432, 1.442695
        %v1483 = vpow.pop %v1482
        %v1484 = vmul.f32 %v1433, 1.442695
        %v1485 = vpow.pop %v1484
        %v1486 = vmul.f32 %v1434, 1.442695
        %v1487 = vpow.pop %v1486
        %v1488 = vmul.f32 %v1435, 1.442695
        %v1489 = vpow.pop %v1488
        %v1490 = vmul.f32 %v1436, 1.442695
        %v1491 = vpow.pop %v1490
        %v1492 = vmul.f32 %v1437, 1.442695
        %v1493 = vpow.pop %v1492
        %v1494 = vmul.f32 %v1438, 1.442695
        %v1495 = vpow.pop %v1494
        %v1496 = vmul.f32 %v1439, 1.442695
        %v1497 = vpow.pop %v1496
        %v1498 = vmul.f32 %v1440, 1.442695
        %v1499 = vpow.pop %v1498
        %v1500 = vmul.f32 %v1441, 1.442695
        %v1501 = vpow.pop %v1500
        %v1502 = vmul.f32 %v1442, 1.442695
        %v1503 = vpow.pop %v1502
        %v1504 = vmul.f32 %v1443, 1.442695
        %v1505 = vpow.pop %v1504
        %v1506 = vmul.f32 %v1444, 1.442695
        %v1507 = vpow.pop %v1506
        %v1508 = vmul.f32 %v1445, 1.442695
        %v1509 = vpow.pop %v1508
        %v1510 = vadd.f32 %v1447, 1.0
        %v1511 = vadd.f32 %v1449, 1.0
        %v1512 = vadd.f32 %v1451, 1.0
        %v1513 = vadd.f32 %v1453, 1.0
        %v1514 = vadd.f32 %v1455, 1.0
        %v1515 = vadd.f32 %v1457, 1.0
        %v1516 = vadd.f32 %v1459, 1.0
        %v1517 = vadd.f32 %v1461, 1.0
        %v1518 = vadd.f32 %v1463, 1.0
        %v1519 = vadd.f32 %v1465, 1.0
        %v1520 = vadd.f32 %v1467, 1.0
        %v1521 = vadd.f32 %v1469, 1.0
        %v1522 = vadd.f32 %v1471, 1.0
        %v1523 = vadd.f32 %v1473, 1.0
        %v1524 = vadd.f32 %v1475, 1.0
        %v1525 = vadd.f32 %v1477, 1.0
        %v1526 = vadd.f32 %v1479, 1.0
        %v1527 = vadd.f32 %v1481, 1.0
        %v1528 = vadd.f32 %v1483, 1.0
        %v1529 = vadd.f32 %v1485, 1.0
        %v1530 = vadd.f32 %v1487, 1.0
        %v1531 = vadd.f32 %v1489, 1.0
        %v1532 = vadd.f32 %v1491, 1.0
        %v1533 = vadd.f32 %v1493, 1.0
        %v1534 = vadd.f32 %v1495, 1.0
        %v1535 = vadd.f32 %v1497, 1.0
        %v1536 = vadd.f32 %v1499, 1.0
        %v1537 = vadd.f32 %v1501, 1.0
        %v1538 = vadd.f32 %v1503, 1.0
        %v1539 = vadd.f32 %v1505, 1.0
        %v1540 = vadd.f32 %v1507, 1.0
        %v1541 = vadd.f32 %v1509, 1.0
        %v1542 = vlog2.pop %v1510
        %v1543 = vmul.f32 %v1542, 0.6931472
        %v1544 = vlog2.pop %v1511
        %v1545 = vmul.f32 %v1544, 0.6931472
        %v1546 = vlog2.pop %v1512
        %v1547 = vmul.f32 %v1546, 0.6931472
        %v1548 = vlog2.pop %v1513
        %v1549 = vmul.f32 %v1548, 0.6931472
        %v1550 = vlog2.pop %v1514
        %v1551 = vmul.f32 %v1550, 0.6931472
        %v1552 = vlog2.pop %v1515
        %v1553 = vmul.f32 %v1552, 0.6931472
        %v1554 = vlog2.pop %v1516
        %v1555 = vmul.f32 %v1554, 0.6931472
        %v1556 = vlog2.pop %v1517
        %v1557 = vmul.f32 %v1556, 0.6931472
        %v1558 = vlog2.pop %v1518
        %v1559 = vmul.f32 %v1558, 0.6931472
        %v1560 = vlog2.pop %v1519
        %v1561 = vmul.f32 %v1560, 0.6931472
        %v1562 = vlog2.pop %v1520
        %v1563 = vmul.f32 %v1562, 0.6931472
        %v1564 = vlog2.pop %v1521
        %v1565 = vmul.f32 %v1564, 0.6931472
        %v1566 = vlog2.pop %v1522
        %v1567 = vmul.f32 %v1566, 0.6931472
        %v1568 = vlog2.pop %v1523
        %v1569 = vmul.f32 %v1568, 0.6931472
        %v1570 = vlog2.pop %v1524
        %v1571 = vmul.f32 %v1570, 0.6931472
        %v1572 = vlog2.pop %v1525
        %v1573 = vmul.f32 %v1572, 0.6931472
        %v1574 = vlog2.pop %v1526
        %v1575 = vmul.f32 %v1574, 0.6931472
        %v1576 = vlog2.pop %v1527
        %v1577 = vmul.f32 %v1576, 0.6931472
        %v1578 = vlog2.pop %v1528
        %v1579 = vmul.f32 %v1578, 0.6931472
        %v1580 = vlog2.pop %v1529
        %v1581 = vmul.f32 %v1580, 0.6931472
        %v1582 = vlog2.pop %v1530
        %v1583 = vmul.f32 %v1582, 0.6931472
        %v1584 = vlog2.pop %v1531
        %v1585 = vmul.f32 %v1584, 0.6931472
        %v1586 = vlog2.pop %v1532
        %v1587 = vmul.f32 %v1586, 0.6931472
        %v1588 = vlog2.pop %v1533
        %v1589 = vmul.f32 %v1588, 0.6931472
        %v1590 = vlog2.pop %v1534
        %v1591 = vmul.f32 %v1590, 0.6931472
        %v1592 = vlog2.pop %v1535
        %v1593 = vmul.f32 %v1592, 0.6931472
        %v1594 = vlog2.pop %v1536
        %v1595 = vmul.f32 %v1594, 0.6931472
        %v1596 = vlog2.pop %v1537
        %v1597 = vmul.f32 %v1596, 0.6931472
        %v1598 = vlog2.pop %v1538
        %v1599 = vmul.f32 %v1598, 0.6931472
        %v1600 = vlog2.pop %v1539
        %v1601 = vmul.f32 %v1600, 0.6931472
        %v1602 = vlog2.pop %v1540
        %v1603 = vmul.f32 %v1602, 0.6931472
        %v1604 = vlog2.pop %v1541
        %v1605 = vmul.f32 %v1604, 0.6931472
        %v1606 = vadd.f32 %v1350, %v1543
        %v1607 = vadd.f32 %v1351, %v1545
        %v1608 = vadd.f32 %v1352, %v1547
        %v1609 = vadd.f32 %v1353, %v1549
        %v1610 = vadd.f32 %v1354, %v1551
        %v1611 = vadd.f32 %v1355, %v1553
        %v1612 = vadd.f32 %v1356, %v1555
        %v1613 = vadd.f32 %v1357, %v1557
        %v1614 = vadd.f32 %v1358, %v1559
        %v1615 = vadd.f32 %v1359, %v1561
        %v1616 = vadd.f32 %v1360, %v1563
        %v1617 = vadd.f32 %v1361, %v1565
        %v1618 = vadd.f32 %v1362, %v1567
        %v1619 = vadd.f32 %v1363, %v1569
        %v1620 = vadd.f32 %v1364, %v1571
        %v1621 = vadd.f32 %v1365, %v1573
        %v1622 = vadd.f32 %v1366, %v1575
        %v1623 = vadd.f32 %v1367, %v1577
        %v1624 = vadd.f32 %v1368, %v1579
        %v1625 = vadd.f32 %v1369, %v1581
        %v1626 = vadd.f32 %v1370, %v1583
        %v1627 = vadd.f32 %v1371, %v1585
        %v1628 = vadd.f32 %v1372, %v1587
        %v1629 = vadd.f32 %v1373, %v1589
        %v1630 = vadd.f32 %v1374, %v1591
        %v1631 = vadd.f32 %v1375, %v1593
        %v1632 = vadd.f32 %v1376, %v1595
        %v1633 = vadd.f32 %v1377, %v1597
        %v1634 = vadd.f32 %v1378, %v1599
        %v1635 = vadd.f32 %v1379, %v1601
        %v1636 = vadd.f32 %v1380, %v1603
        %v1637 = vadd.f32 %v1381, %v1605
        %v1638 = vmul.f32 %v1606, 0.9
        %v1639 = vmul.f32 %v1607, 0.9
        %v1640 = vmul.f32 %v1608, 0.9
        %v1641 = vmul.f32 %v1609, 0.9
        %v1642 = vmul.f32 %v1610, 0.9
        %v1643 = vmul.f32 %v1611, 0.9
        %v1644 = vmul.f32 %v1612, 0.9
        %v1645 = vmul.f32 %v1613, 0.9
        %v1646 = vmul.f32 %v1614, 0.9
        %v1647 = vmul.f32 %v1615, 0.9
        %v1648 = vmul.f32 %v1616, 0.9
        %v1649 = vmul.f32 %v1617, 0.9
        %v1650 = vmul.f32 %v1618, 0.9
        %v1651 = vmul.f32 %v1619, 0.9
        %v1652 = vmul.f32 %v1620, 0.9
        %v1653 = vmul.f32 %v1621, 0.9
        %v1654 = vmul.f32 %v1622, 0.9
        %v1655 = vmul.f32 %v1623, 0.9
        %v1656 = vmul.f32 %v1624, 0.9
        %v1657 = vmul.f32 %v1625, 0.9
        %v1658 = vmul.f32 %v1626, 0.9
        %v1659 = vmul.f32 %v1627, 0.9
        %v1660 = vmul.f32 %v1628, 0.9
        %v1661 = vmul.f32 %v1629, 0.9
        %v1662 = vmul.f32 %v1630, 0.9
        %v1663 = vmul.f32 %v1631, 0.9
        %v1664 = vmul.f32 %v1632, 0.9
        %v1665 = vmul.f32 %v1633, 0.9
        %v1666 = vmul.f32 %v1634, 0.9
        %v1667 = vmul.f32 %v1635, 0.9
        %v1668 = vmul.f32 %v1636, 0.9
        %v1669 = vmul.f32 %v1637, 0.9
        %v1670 = vadd.f32 %v1638, 0.1
        %v1671 = vadd.f32 %v1639, 0.1
        %v1672 = vadd.f32 %v1640, 0.1
        %v1673 = vadd.f32 %v1641, 0.1
        %v1674 = vadd.f32 %v1642, 0.1
        %v1675 = vadd.f32 %v1643, 0.1
        %v1676 = vadd.f32 %v1644, 0.1
        %v1677 = vadd.f32 %v1645, 0.1
        %v1678 = vadd.f32 %v1646, 0.1
        %v1679 = vadd.f32 %v1647, 0.1
        %v1680 = vadd.f32 %v1648, 0.1
        %v1681 = vadd.f32 %v1649, 0.1
        %v1682 = vadd.f32 %v1650, 0.1
        %v1683 = vadd.f32 %v1651, 0.1
        %v1684 = vadd.f32 %v1652, 0.1
        %v1685 = vadd.f32 %v1653, 0.1
        %v1686 = vadd.f32 %v1654, 0.1
        %v1687 = vadd.f32 %v1655, 0.1
        %v1688 = vadd.f32 %v1656, 0.1
        %v1689 = vadd.f32 %v1657, 0.1
        %v1690 = vadd.f32 %v1658, 0.1
        %v1691 = vadd.f32 %v1659, 0.1
        %v1692 = vadd.f32 %v1660, 0.1
        %v1693 = vadd.f32 %v1661, 0.1
        %v1694 = vadd.f32 %v1662, 0.1
        %v1695 = vadd.f32 %v1663, 0.1
        %v1696 = vadd.f32 %v1664, 0.1
        %v1697 = vadd.f32 %v1665, 0.1
        %v1698 = vadd.f32 %v1666, 0.1
        %v1699 = vadd.f32 %v1667, 0.1
        %v1700 = vadd.f32 %v1668, 0.1
        %v1701 = vadd.f32 %v1669, 0.1
        %v1702 = vrcp.pop %v1318
        %v1703 = vrcp.pop %v1319
        %v1704 = vrcp.pop %v1320
        %v1705 = vrcp.pop %v1321
        %v1706 = vrcp.pop %v1322
        %v1707 = vrcp.pop %v1323
        %v1708 = vrcp.pop %v1324
        %v1709 = vrcp.pop %v1325
        %v1710 = vrcp.pop %v1326
        %v1711 = vrcp.pop %v1327
        %v1712 = vrcp.pop %v1328
        %v1713 = vrcp.pop %v1329
        %v1714 = vrcp.pop %v1330
        %v1715 = vrcp.pop %v1331
        %v1716 = vrcp.pop %v1332
        %v1717 = vrcp.pop %v1333
        %v1718 = vrcp.pop %v1334
        %v1719 = vrcp.pop %v1335
        %v1720 = vrcp.pop %v1336
        %v1721 = vrcp.pop %v1337
        %v1722 = vrcp.pop %v1338
        %v1723 = vrcp.pop %v1339
        %v1724 = vrcp.pop %v1340
        %v1725 = vrcp.pop %v1341
        %v1726 = vrcp.pop %v1342
        %v1727 = vrcp.pop %v1343
        %v1728 = vrcp.pop %v1344
        %v1729 = vrcp.pop %v1345
        %v1730 = vrcp.pop %v1346
        %v1731 = vrcp.pop %v1347
        %v1732 = vrcp.pop %v1348
        %v1733 = vrcp.pop %v1349
        %v1734 = vmul.f32 %v1670, %v1702
        %v1735 = vmul.f32 %v1671, %v1703
        %v1736 = vmul.f32 %v1672, %v1704
        %v1737 = vmul.f32 %v1673, %v1705
        %v1738 = vmul.f32 %v1674, %v1706
        %v1739 = vmul.f32 %v1675, %v1707
        %v1740 = vmul.f32 %v1676, %v1708
        %v1741 = vmul.f32 %v1677, %v1709
        %v1742 = vmul.f32 %v1678, %v1710
        %v1743 = vmul.f32 %v1679, %v1711
        %v1744 = vmul.f32 %v1680, %v1712
        %v1745 = vmul.f32 %v1681, %v1713
        %v1746 = vmul.f32 %v1682, %v1714
        %v1747 = vmul.f32 %v1683, %v1715
        %v1748 = vmul.f32 %v1684, %v1716
        %v1749 = vmul.f32 %v1685, %v1717
        %v1750 = vmul.f32 %v1686, %v1718
        %v1751 = vmul.f32 %v1687, %v1719
        %v1752 = vmul.f32 %v1688, %v1720
        %v1753 = vmul.f32 %v1689, %v1721
        %v1754 = vmul.f32 %v1690, %v1722
        %v1755 = vmul.f32 %v1691, %v1723
        %v1756 = vmul.f32 %v1692, %v1724
        %v1757 = vmul.f32 %v1693, %v1725
        %v1758 = vmul.f32 %v1694, %v1726
        %v1759 = vmul.f32 %v1695, %v1727
        %v1760 = vmul.f32 %v1696, %v1728
        %v1761 = vmul.f32 %v1697, %v1729
        %v1762 = vmul.f32 %v1698, %v1730
        %v1763 = vmul.f32 %v1699, %v1731
        %v1764 = vmul.f32 %v1700, %v1732
        %v1765 = vmul.f32 %v1701, %v1733
        %v1766 = vmul.f32 %v1734, %v1734
        %v1767 = vmul.f32 %v1735, %v1735
        %v1768 = vmul.f32 %v1736, %v1736
        %v1769 = vmul.f32 %v1737, %v1737
        %v1770 = vmul.f32 %v1738, %v1738
        %v1771 = vmul.f32 %v1739, %v1739
        %v1772 = vmul.f32 %v1740, %v1740
        %v1773 = vmul.f32 %v1741, %v1741
        %v1774 = vmul.f32 %v1742, %v1742
        %v1775 = vmul.f32 %v1743, %v1743
        %v1776 = vmul.f32 %v1744, %v1744
        %v1777 = vmul.f32 %v1745, %v1745
        %v1778 = vmul.f32 %v1746, %v1746
        %v1779 = vmul.f32 %v1747, %v1747
        %v1780 = vmul.f32 %v1748, %v1748
        %v1781 = vmul.f32 %v1749, %v1749
        %v1782 = vmul.f32 %v1750, %v1750
        %v1783 = vmul.f32 %v1751, %v1751
        %v1784 = vmul.f32 %v1752, %v1752
        %v1785 = vmul.f32 %v1753, %v1753
        %v1786 = vmul.f32 %v1754, %v1754
        %v1787 = vmul.f32 %v1755, %v1755
        %v1788 = vmul.f32 %v1756, %v1756
        %v1789 = vmul.f32 %v1757, %v1757
        %v1790 = vmul.f32 %v1758, %v1758
        %v1791 = vmul.f32 %v1759, %v1759
        %v1792 = vmul.f32 %v1760, %v1760
        %v1793 = vmul.f32 %v1761, %v1761
        %v1794 = vmul.f32 %v1762, %v1762
        %v1795 = vmul.f32 %v1763, %v1763
        %v1796 = vmul.f32 %v1764, %v1764
        %v1797 = vmul.f32 %v1765, %v1765
        %v1798 = vsub.f32 %v840, %v680
        %v1799 = vsub.f32 %v844, %v684
        %v1800 = vsub.f32 %v850, %v690
        %v1801 = vsub.f32 %v854, %v694
        %v1802 = vsub.f32 %v860, %v700
        %v1803 = vsub.f32 %v864, %v704
        %v1804 = vsub.f32 %v870, %v710
        %v1805 = vsub.f32 %v874, %v714
        %v1806 = vsub.f32 %v880, %v720
        %v1807 = vsub.f32 %v884, %v724
        %v1808 = vsub.f32 %v890, %v730
        %v1809 = vsub.f32 %v894, %v734
        %v1810 = vsub.f32 %v900, %v740
        %v1811 = vsub.f32 %v904, %v744
        %v1812 = vsub.f32 %v910, %v750
        %v1813 = vsub.f32 %v914, %v754
        %v1814 = vsub.f32 %v920, %v760
        %v1815 = vsub.f32 %v924, %v764
        %v1816 = vsub.f32 %v930, %v770
        %v1817 = vsub.f32 %v934, %v774
        %v1818 = vsub.f32 %v940, %v780
        %v1819 = vsub.f32 %v944, %v784
        %v1820 = vsub.f32 %v950, %v790
        %v1821 = vsub.f32 %v954, %v794
        %v1822 = vsub.f32 %v960, %v800
        %v1823 = vsub.f32 %v964, %v804
        %v1824 = vsub.f32 %v970, %v810
        %v1825 = vsub.f32 %v974, %v814
        %v1826 = vsub.f32 %v980, %v820
        %v1827 = vsub.f32 %v984, %v824
        %v1828 = vsub.f32 %v990, %v830
        %v1829 = vsub.f32 %v994, %v834
        %v1830 = vmul.f32 %v1798, %v1702
        %v1831 = vmul.f32 %v1799, %v1703
        %v1832 = vmul.f32 %v1800, %v1704
        %v1833 = vmul.f32 %v1801, %v1705
        %v1834 = vmul.f32 %v1802, %v1706
        %v1835 = vmul.f32 %v1803, %v1707
        %v1836 = vmul.f32 %v1804, %v1708
        %v1837 = vmul.f32 %v1805, %v1709
        %v1838 = vmul.f32 %v1806, %v1710
        %v1839 = vmul.f32 %v1807, %v1711
        %v1840 = vmul.f32 %v1808, %v1712
        %v1841 = vmul.f32 %v1809, %v1713
        %v1842 = vmul.f32 %v1810, %v1714
        %v1843 = vmul.f32 %v1811, %v1715
        %v1844 = vmul.f32 %v1812, %v1716
        %v1845 = vmul.f32 %v1813, %v1717
        %v1846 = vmul.f32 %v1814, %v1718
        %v1847 = vmul.f32 %v1815, %v1719
        %v1848 = vmul.f32 %v1816, %v1720
        %v1849 = vmul.f32 %v1817, %v1721
        %v1850 = vmul.f32 %v1818, %v1722
        %v1851 = vmul.f32 %v1819, %v1723
        %v1852 = vmul.f32 %v1820, %v1724
        %v1853 = vmul.f32 %v1821, %v1725
        %v1854 = vmul.f32 %v1822, %v1726
        %v1855 = vmul.f32 %v1823, %v1727
        %v1856 = vmul.f32 %v1824, %v1728
        %v1857 = vmul.f32 %v1825, %v1729
        %v1858 = vmul.f32 %v1826, %v1730
        %v1859 = vmul.f32 %v1827, %v1731
        %v1860 = vmul.f32 %v1828, %v1732
        %v1861 = vmul.f32 %v1829, %v1733
        %v1862 = vmul.f32 %v1830, %v1830
        %v1863 = vmul.f32 %v1831, %v1831
        %v1864 = vmul.f32 %v1832, %v1832
        %v1865 = vmul.f32 %v1833, %v1833
        %v1866 = vmul.f32 %v1834, %v1834
        %v1867 = vmul.f32 %v1835, %v1835
        %v1868 = vmul.f32 %v1836, %v1836
        %v1869 = vmul.f32 %v1837, %v1837
        %v1870 = vmul.f32 %v1838, %v1838
        %v1871 = vmul.f32 %v1839, %v1839
        %v1872 = vmul.f32 %v1840, %v1840
        %v1873 = vmul.f32 %v1841, %v1841
        %v1874 = vmul.f32 %v1842, %v1842
        %v1875 = vmul.f32 %v1843, %v1843
        %v1876 = vmul.f32 %v1844, %v1844
        %v1877 = vmul.f32 %v1845, %v1845
        %v1878 = vmul.f32 %v1846, %v1846
        %v1879 = vmul.f32 %v1847, %v1847
        %v1880 = vmul.f32 %v1848, %v1848
        %v1881 = vmul.f32 %v1849, %v1849
        %v1882 = vmul.f32 %v1850, %v1850
        %v1883 = vmul.f32 %v1851, %v1851
        %v1884 = vmul.f32 %v1852, %v1852
        %v1885 = vmul.f32 %v1853, %v1853
        %v1886 = vmul.f32 %v1854, %v1854
        %v1887 = vmul.f32 %v1855, %v1855
        %v1888 = vmul.f32 %v1856, %v1856
        %v1889 = vmul.f32 %v1857, %v1857
        %v1890 = vmul.f32 %v1858, %v1858
        %v1891 = vmul.f32 %v1859, %v1859
        %v1892 = vmul.f32 %v1860, %v1860
        %v1893 = vmul.f32 %v1861, %v1861
        %v1894 = vadd.f32 %v1766, %v1862
        %v1895 = vadd.f32 %v1767, %v1863
        %v1896 = vadd.f32 %v1768, %v1864
        %v1897 = vadd.f32 %v1769, %v1865
        %v1898 = vadd.f32 %v1770, %v1866
        %v1899 = vadd.f32 %v1771, %v1867
        %v1900 = vadd.f32 %v1772, %v1868
        %v1901 = vadd.f32 %v1773, %v1869
        %v1902 = vadd.f32 %v1774, %v1870
        %v1903 = vadd.f32 %v1775, %v1871
        %v1904 = vadd.f32 %v1776, %v1872
        %v1905 = vadd.f32 %v1777, %v1873
        %v1906 = vadd.f32 %v1778, %v1874
        %v1907 = vadd.f32 %v1779, %v1875
        %v1908 = vadd.f32 %v1780, %v1876
        %v1909 = vadd.f32 %v1781, %v1877
        %v1910 = vadd.f32 %v1782, %v1878
        %v1911 = vadd.f32 %v1783, %v1879
        %v1912 = vadd.f32 %v1784, %v1880
        %v1913 = vadd.f32 %v1785, %v1881
        %v1914 = vadd.f32 %v1786, %v1882
        %v1915 = vadd.f32 %v1787, %v1883
        %v1916 = vadd.f32 %v1788, %v1884
        %v1917 = vadd.f32 %v1789, %v1885
        %v1918 = vadd.f32 %v1790, %v1886
        %v1919 = vadd.f32 %v1791, %v1887
        %v1920 = vadd.f32 %v1792, %v1888
        %v1921 = vadd.f32 %v1793, %v1889
        %v1922 = vadd.f32 %v1794, %v1890
        %v1923 = vadd.f32 %v1795, %v1891
        %v1924 = vadd.f32 %v1796, %v1892
        %v1925 = vadd.f32 %v1797, %v1893
        %v1926 = vsub.f32 %v1894, 1.0
        %v1927 = vsub.f32 %v1895, 1.0
        %v1928 = vsub.f32 %v1896, 1.0
        %v1929 = vsub.f32 %v1897, 1.0
        %v1930 = vsub.f32 %v1898, 1.0
        %v1931 = vsub.f32 %v1899, 1.0
        %v1932 = vsub.f32 %v1900, 1.0
        %v1933 = vsub.f32 %v1901, 1.0
        %v1934 = vsub.f32 %v1902, 1.0
        %v1935 = vsub.f32 %v1903, 1.0
        %v1936 = vsub.f32 %v1904, 1.0
        %v1937 = vsub.f32 %v1905, 1.0
        %v1938 = vsub.f32 %v1906, 1.0
        %v1939 = vsub.f32 %v1907, 1.0
        %v1940 = vsub.f32 %v1908, 1.0
        %v1941 = vsub.f32 %v1909, 1.0
        %v1942 = vsub.f32 %v1910, 1.0
        %v1943 = vsub.f32 %v1911, 1.0
        %v1944 = vsub.f32 %v1912, 1.0
        %v1945 = vsub.f32 %v1913, 1.0
        %v1946 = vsub.f32 %v1914, 1.0
        %v1947 = vsub.f32 %v1915, 1.0
        %v1948 = vsub.f32 %v1916, 1.0
        %v1949 = vsub.f32 %v1917, 1.0
        %v1950 = vsub.f32 %v1918, 1.0
        %v1951 = vsub.f32 %v1919, 1.0
        %v1952 = vsub.f32 %v1920, 1.0
        %v1953 = vsub.f32 %v1921, 1.0
        %v1954 = vsub.f32 %v1922, 1.0
        %v1955 = vsub.f32 %v1923, 1.0
        %v1956 = vsub.f32 %v1924, 1.0
        %v1957 = vsub.f32 %v1925, 1.0
        %v1958 = vlog2.pop %v1766
        %v1959 = vmul.f32 %v1958, 0.6931472
        %v1960 = vlog2.pop %v1767
        %v1961 = vmul.f32 %v1960, 0.6931472
        %v1962 = vlog2.pop %v1768
        %v1963 = vmul.f32 %v1962, 0.6931472
        %v1964 = vlog2.pop %v1769
        %v1965 = vmul.f32 %v1964, 0.6931472
        %v1966 = vlog2.pop %v1770
        %v1967 = vmul.f32 %v1966, 0.6931472
        %v1968 = vlog2.pop %v1771
        %v1969 = vmul.f32 %v1968, 0.6931472
        %v1970 = vlog2.pop %v1772
        %v1971 = vmul.f32 %v1970, 0.6931472
        %v1972 = vlog2.pop %v1773
        %v1973 = vmul.f32 %v1972, 0.6931472
        %v1974 = vlog2.pop %v1774
        %v1975 = vmul.f32 %v1974, 0.6931472
        %v1976 = vlog2.pop %v1775
        %v1977 = vmul.f32 %v1976, 0.6931472
        %v1978 = vlog2.pop %v1776
        %v1979 = vmul.f32 %v1978, 0.6931472
        %v1980 = vlog2.pop %v1777
        %v1981 = vmul.f32 %v1980, 0.6931472
        %v1982 = vlog2.pop %v1778
        %v1983 = vmul.f32 %v1982, 0.6931472
        %v1984 = vlog2.pop %v1779
        %v1985 = vmul.f32 %v1984, 0.6931472
        %v1986 = vlog2.pop %v1780
        %v1987 = vmul.f32 %v1986, 0.6931472
        %v1988 = vlog2.pop %v1781
        %v1989 = vmul.f32 %v1988, 0.6931472
        %v1990 = vlog2.pop %v1782
        %v1991 = vmul.f32 %v1990, 0.6931472
        %v1992 = vlog2.pop %v1783
        %v1993 = vmul.f32 %v1992, 0.6931472
        %v1994 = vlog2.pop %v1784
        %v1995 = vmul.f32 %v1994, 0.6931472
        %v1996 = vlog2.pop %v1785
        %v1997 = vmul.f32 %v1996, 0.6931472
        %v1998 = vlog2.pop %v1786
        %v1999 = vmul.f32 %v1998, 0.6931472
        %v2000 = vlog2.pop %v1787
        %v2001 = vmul.f32 %v2000, 0.6931472
        %v2002 = vlog2.pop %v1788
        %v2003 = vmul.f32 %v2002, 0.6931472
        %v2004 = vlog2.pop %v1789
        %v2005 = vmul.f32 %v2004, 0.6931472
        %v2006 = vlog2.pop %v1790
        %v2007 = vmul.f32 %v2006, 0.6931472
        %v2008 = vlog2.pop %v1791
        %v2009 = vmul.f32 %v2008, 0.6931472
        %v2010 = vlog2.pop %v1792
        %v2011 = vmul.f32 %v2010, 0.6931472
        %v2012 = vlog2.pop %v1793
        %v2013 = vmul.f32 %v2012, 0.6931472
        %v2014 = vlog2.pop %v1794
        %v2015 = vmul.f32 %v2014, 0.6931472
        %v2016 = vlog2.pop %v1795
        %v2017 = vmul.f32 %v2016, 0.6931472
        %v2018 = vlog2.pop %v1796
        %v2019 = vmul.f32 %v2018, 0.6931472
        %v2020 = vlog2.pop %v1797
        %v2021 = vmul.f32 %v2020, 0.6931472
        %v2022 = vsub.f32 %v1926, %v1959
        %v2023 = vsub.f32 %v1927, %v1961
        %v2024 = vsub.f32 %v1928, %v1963
        %v2025 = vsub.f32 %v1929, %v1965
        %v2026 = vsub.f32 %v1930, %v1967
        %v2027 = vsub.f32 %v1931, %v1969
        %v2028 = vsub.f32 %v1932, %v1971
        %v2029 = vsub.f32 %v1933, %v1973
        %v2030 = vsub.f32 %v1934, %v1975
        %v2031 = vsub.f32 %v1935, %v1977
        %v2032 = vsub.f32 %v1936, %v1979
        %v2033 = vsub.f32 %v1937, %v1981
        %v2034 = vsub.f32 %v1938, %v1983
        %v2035 = vsub.f32 %v1939, %v1985
        %v2036 = vsub.f32 %v1940, %v1987
        %v2037 = vsub.f32 %v1941, %v1989
        %v2038 = vsub.f32 %v1942, %v1991
        %v2039 = vsub.f32 %v1943, %v1993
        %v2040 = vsub.f32 %v1944, %v1995
        %v2041 = vsub.f32 %v1945, %v1997
        %v2042 = vsub.f32 %v1946, %v1999
        %v2043 = vsub.f32 %v1947, %v2001
        %v2044 = vsub.f32 %v1948, %v2003
        %v2045 = vsub.f32 %v1949, %v2005
        %v2046 = vsub.f32 %v1950, %v2007
        %v2047 = vsub.f32 %v1951, %v2009
        %v2048 = vsub.f32 %v1952, %v2011
        %v2049 = vsub.f32 %v1953, %v2013
        %v2050 = vsub.f32 %v1954, %v2015
        %v2051 = vsub.f32 %v1955, %v2017
        %v2052 = vsub.f32 %v1956, %v2019
        %v2053 = vsub.f32 %v1957, %v2021
        %v2054 = vmul.f32 %v2022, 0.5
        %v2055 = vmul.f32 %v2023, 0.5
        %v2056 = vmul.f32 %v2024, 0.5
        %v2057 = vmul.f32 %v2025, 0.5
        %v2058 = vmul.f32 %v2026, 0.5
        %v2059 = vmul.f32 %v2027, 0.5
        %v2060 = vmul.f32 %v2028, 0.5
        %v2061 = vmul.f32 %v2029, 0.5
        %v2062 = vmul.f32 %v2030, 0.5
        %v2063 = vmul.f32 %v2031, 0.5
        %v2064 = vmul.f32 %v2032, 0.5
        %v2065 = vmul.f32 %v2033, 0.5
        %v2066 = vmul.f32 %v2034, 0.5
        %v2067 = vmul.f32 %v2035, 0.5
        %v2068 = vmul.f32 %v2036, 0.5
        %v2069 = vmul.f32 %v2037, 0.5
        %v2070 = vmul.f32 %v2038, 0.5
        %v2071 = vmul.f32 %v2039, 0.5
        %v2072 = vmul.f32 %v2040, 0.5
        %v2073 = vmul.f32 %v2041, 0.5
        %v2074 = vmul.f32 %v2042, 0.5
        %v2075 = vmul.f32 %v2043, 0.5
        %v2076 = vmul.f32 %v2044, 0.5
        %v2077 = vmul.f32 %v2045, 0.5
        %v2078 = vmul.f32 %v2046, 0.5
        %v2079 = vmul.f32 %v2047, 0.5
        %v2080 = vmul.f32 %v2048, 0.5
        %v2081 = vmul.f32 %v2049, 0.5
        %v2082 = vmul.f32 %v2050, 0.5
        %v2083 = vmul.f32 %v2051, 0.5
        %v2084 = vmul.f32 %v2052, 0.5
        %v2085 = vmul.f32 %v2053, 0.5
        %2086 = vst [vmem:[%s261] sm:$0xff] %v840
        %2087 = vst [vmem:[%s261 + $0x8] sm:$0xff] %v844
        %2088 = vst [vmem:[%s261 + $0x10] sm:$0xff] %v850
        %2089 = vst [vmem:[%s261 + $0x18] sm:$0xff] %v854
        %2090 = vst [vmem:[%s261 + $0x20] sm:$0xff] %v860
        %2091 = vst [vmem:[%s261 + $0x28] sm:$0xff] %v864
        %2092 = vst [vmem:[%s261 + $0x30] sm:$0xff] %v870
        %2093 = vst [vmem:[%s261 + $0x38] sm:$0xff] %v874
        %2094 = vst [vmem:[%s261 + $0x40] sm:$0xff] %v880
        %2095 = vst [vmem:[%s261 + $0x48] sm:$0xff] %v884
        %2096 = vst [vmem:[%s261 + $0x50] sm:$0xff] %v890
        %2097 = vst [vmem:[%s261 + $0x58] sm:$0xff] %v894
        %2098 = vst [vmem:[%s261 + $0x60] sm:$0xff] %v900
        %2099 = vst [vmem:[%s261 + $0x68] sm:$0xff] %v904
        %2100 = vst [vmem:[%s261 + $0x70] sm:$0xff] %v910
        %2101 = vst [vmem:[%s261 + $0x78] sm:$0xff] %v914
        %2102 = vst [vmem:[%s261 + $0x80] sm:$0xff] %v920
        %2103 = vst [vmem:[%s261 + $0x88] sm:$0xff] %v924
        %2104 = vst [vmem:[%s261 + $0x90] sm:$0xff] %v930
        %2105 = vst [vmem:[%s261 + $0x98] sm:$0xff] %v934
        %2106 = vst [vmem:[%s261 + $0xa0] sm:$0xff] %v940
        %2107 = vst [vmem:[%s261 + $0xa8] sm:$0xff] %v944
        %2108 = vst [vmem:[%s261 + $0xb0] sm:$0xff] %v950
        %2109 = vst [vmem:[%s261 + $0xb8] sm:$0xff] %v954
        %2110 = vst [vmem:[%s261 + $0xc0] sm:$0xff] %v960
        %2111 = vst [vmem:[%s261 + $0xc8] sm:$0xff] %v964
        %2112 = vst [vmem:[%s261 + $0xd0] sm:$0xff] %v970
        %2113 = vst [vmem:[%s261 + $0xd8] sm:$0xff] %v974
        %2114 = vst [vmem:[%s261 + $0xe0] sm:$0xff] %v980
        %2115 = vst [vmem:[%s261 + $0xe8] sm:$0xff] %v984
        %2116 = vst [vmem:[%s261 + $0xf0] sm:$0xff] %v990
        %2117 = vst [vmem:[%s261 + $0xf8] sm:$0xff] %v994
        %2118 = vst [vmem:[%s268] sm:$0xff] %v1670
        %2119 = vst [vmem:[%s268 + $0x8] sm:$0xff] %v1671
        %2120 = vst [vmem:[%s268 + $0x10] sm:$0xff] %v1672
        %2121 = vst [vmem:[%s268 + $0x18] sm:$0xff] %v1673
        %2122 = vst [vmem:[%s268 + $0x20] sm:$0xff] %v1674
        %2123 = vst [vmem:[%s268 + $0x28] sm:$0xff] %v1675
        %2124 = vst [vmem:[%s268 + $0x30] sm:$0xff] %v1676
        %2125 = vst [vmem:[%s268 + $0x38] sm:$0xff] %v1677
        %2126 = vst [vmem:[%s268 + $0x40] sm:$0xff] %v1678
        %2127 = vst [vmem:[%s268 + $0x48] sm:$0xff] %v1679
        %2128 = vst [vmem:[%s268 + $0x50] sm:$0xff] %v1680
        %2129 = vst [vmem:[%s268 + $0x58] sm:$0xff] %v1681
        %2130 = vst [vmem:[%s268 + $0x60] sm:$0xff] %v1682
        %2131 = vst [vmem:[%s268 + $0x68] sm:$0xff] %v1683
        %2132 = vst [vmem:[%s268 + $0x70] sm:$0xff] %v1684
        %2133 = vst [vmem:[%s268 + $0x78] sm:$0xff] %v1685
        %2134 = vst [vmem:[%s268 + $0x80] sm:$0xff] %v1686
        %2135 = vst [vmem:[%s268 + $0x88] sm:$0xff] %v1687
        %2136 = vst [vmem:[%s268 + $0x90] sm:$0xff] %v1688
        %2137 = vst [vmem:[%s268 + $0x98] sm:$0xff] %v1689
        %2138 = vst [vmem:[%s268 + $0xa0] sm:$0xff] %v1690
        %2139 = vst [vmem:[%s268 + $0xa8] sm:$0xff] %v1691
        %2140 = vst [vmem:[%s268 + $0xb0] sm:$0xff] %v1692
        %2141 = vst [vmem:[%s268 + $0xb8] sm:$0xff] %v1693
        %2142 = vst [vmem:[%s268 + $0xc0] sm:$0xff] %v1694
        %2143 = vst [vmem:[%s268 + $0xc8] sm:$0xff] %v1695
        %2144 = vst [vmem:[%s268 + $0xd0] sm:$0xff] %v1696
        %2145 = vst [vmem:[%s268 + $0xd8] sm:$0xff] %v1697
        %2146 = vst [vmem:[%s268 + $0xe0] sm:$0xff] %v1698
        %2147 = vst [vmem:[%s268 + $0xe8] sm:$0xff] %v1699
        %2148 = vst [vmem:[%s268 + $0xf0] sm:$0xff] %v1700
        %2149 = vst [vmem:[%s268 + $0xf8] sm:$0xff] %v1701
        %2150 = vst [vmem:[%s275] sm:$0xff] %v2054
        %2151 = vst [vmem:[%s275 + $0x8] sm:$0xff] %v2055
        %2152 = vst [vmem:[%s275 + $0x10] sm:$0xff] %v2056
        %2153 = vst [vmem:[%s275 + $0x18] sm:$0xff] %v2057
        %2154 = vst [vmem:[%s275 + $0x20] sm:$0xff] %v2058
        %2155 = vst [vmem:[%s275 + $0x28] sm:$0xff] %v2059
        %2156 = vst [vmem:[%s275 + $0x30] sm:$0xff] %v2060
        %2157 = vst [vmem:[%s275 + $0x38] sm:$0xff] %v2061
        %2158 = vst [vmem:[%s275 + $0x40] sm:$0xff] %v2062
        %2159 = vst [vmem:[%s275 + $0x48] sm:$0xff] %v2063
        %2160 = vst [vmem:[%s275 + $0x50] sm:$0xff] %v2064
        %2161 = vst [vmem:[%s275 + $0x58] sm:$0xff] %v2065
        %2162 = vst [vmem:[%s275 + $0x60] sm:$0xff] %v2066
        %2163 = vst [vmem:[%s275 + $0x68] sm:$0xff] %v2067
        %2164 = vst [vmem:[%s275 + $0x70] sm:$0xff] %v2068
        %2165 = vst [vmem:[%s275 + $0x78] sm:$0xff] %v2069
        %2166 = vst [vmem:[%s275 + $0x80] sm:$0xff] %v2070
        %2167 = vst [vmem:[%s275 + $0x88] sm:$0xff] %v2071
        %2168 = vst [vmem:[%s275 + $0x90] sm:$0xff] %v2072
        %2169 = vst [vmem:[%s275 + $0x98] sm:$0xff] %v2073
        %2170 = vst [vmem:[%s275 + $0xa0] sm:$0xff] %v2074
        %2171 = vst [vmem:[%s275 + $0xa8] sm:$0xff] %v2075
        %2172 = vst [vmem:[%s275 + $0xb0] sm:$0xff] %v2076
        %2173 = vst [vmem:[%s275 + $0xb8] sm:$0xff] %v2077
        %2174 = vst [vmem:[%s275 + $0xc0] sm:$0xff] %v2078
        %2175 = vst [vmem:[%s275 + $0xc8] sm:$0xff] %v2079
        %2176 = vst [vmem:[%s275 + $0xd0] sm:$0xff] %v2080
        %2177 = vst [vmem:[%s275 + $0xd8] sm:$0xff] %v2081
        %2178 = vst [vmem:[%s275 + $0xe0] sm:$0xff] %v2082
        %2179 = vst [vmem:[%s275 + $0xe8] sm:$0xff] %v2083
        %2180 = vst [vmem:[%s275 + $0xf0] sm:$0xff] %v2084
        %2181 = vst [vmem:[%s275 + $0xf8] sm:$0xff] %v2085
        %s2182 = sand.u32 %s103, 1
        %s2183 = scalar_lea.sflag [#allocation4], %s2182
        %s2184 = sand.u32 %s103, 1
        %s2185 = smul.addr %s2184, 256
        %s2186 = scalar_lea.vmem [#allocation7], %s2185
        %s2187 = sand.u32 %s27, 1
        %s2188 = scalar_lea.sflag [#allocation9], %s2187
        %s2189 = sand.u32 %s129, 1
        %s2190 = smul.addr %s2189, 256
        %s2191 = scalar_lea.vmem [#allocation8], %s2190
        %s2192 = sand.u32 %s27, 1
        %s2193 = scalar_lea.sflag [#allocation9], %s2192
        %s2194 = sand.u32 %s155, 1
        %s2195 = smul.addr %s2194, 256
        %s2196 = scalar_lea.vmem [#allocation10], %s2195
        // Predicated region
        $region41: #{tpu_custom_call.1} parent=31 // pred_check
          %p2197 = pneg %p113
        $region42: #{tpu_custom_call.1} parent=31 // pred_check_branch
          %2199 = sbr.rel (%p2197) target = $region44
        $region43: #{tpu_custom_call.1} parent=31 // pred_region
          %s2200 = smul.u32 32, %s27
          %s2202 = ssub.s32 4096, 4096
          %2203 = vsyncadd %s2183, %s2202
          %s2204 = smul.addr %s2200, 128
          %s2205 = scalar_lea.hbm %s3, %s2204
          %s2206 = sshll.u32 %s2186, 4
          %s2207 = int_to_ptr.vmem [resolvable:$true] %s2206
          %2212 = dma.vmem_to_hbm [thread:$0]  %s2207, 4096, %s2205, %s2183, 128, 128, 8
        $region44: #{tpu_custom_call.1} parent=31 // pred_fallthru
          _
        // Predicated region
        $region45: #{tpu_custom_call.1} parent=31 // pred_check
          %p2213 = pneg %p139
        $region46: #{tpu_custom_call.1} parent=31 // pred_check_branch
          %2215 = sbr.rel (%p2213) target = $region48
        $region47: #{tpu_custom_call.1} parent=31 // pred_region
          %s2216 = smul.u32 32, %s27
          %s2218 = ssub.s32 4096, 4096
          %2219 = vsyncadd %s2188, %s2218
          %s2220 = smul.addr %s2216, 128
          %s2221 = scalar_lea.hbm %s4, %s2220
          %s2222 = sshll.u32 %s2191, 4
          %s2223 = int_to_ptr.vmem [resolvable:$true] %s2222
          %2228 = dma.vmem_to_hbm [thread:$0]  %s2223, 4096, %s2221, %s2188, 128, 128, 8
        $region48: #{tpu_custom_call.1} parent=31 // pred_fallthru
          _
        // Predicated region
        $region49: #{tpu_custom_call.1} parent=31 // pred_check
          %p2229 = pneg %p165
        $region50: #{tpu_custom_call.1} parent=31 // pred_check_branch
          %2231 = sbr.rel (%p2229) target = $region52
        $region51: #{tpu_custom_call.1} parent=31 // pred_region
          %s2232 = smul.u32 32, %s27
          %s2234 = ssub.s32 4096, 4096
          %2235 = vsyncadd %s2193, %s2234
          %s2236 = smul.addr %s2232, 128
          %s2237 = scalar_lea.hbm %s5, %s2236
          %s2238 = sshll.u32 %s2196, 4
          %s2239 = int_to_ptr.vmem [resolvable:$true] %s2238
          %2244 = dma.vmem_to_hbm [thread:$0]  %s2239, 4096, %s2237, %s2193, 128, 128, 8
        $region52: #{tpu_custom_call.1} parent=31 // pred_fallthru
          _
      $region32: #{tpu_custom_call.1} parent=5 // pred_fallthru
        _
      %p2245 = scmp.le.s32.totalorder 2, %s22
      // Predicated region
      $region53: #{tpu_custom_call.1} parent=5 // pred_check
        %p2246 = pneg %p2245
      $region54: #{tpu_custom_call.1} parent=5 // pred_check_branch
        %2248 = sbr.rel (%p2246) target = $region56
      $region55: #{tpu_custom_call.1} parent=5 // pred_region
        %s2249 = ssub.s32 %s22, 2
        // Predicated region
        $region57: #{tpu_custom_call.1} parent=55 // pred_check
          %p2250 = pneg %p119
        $region58: #{tpu_custom_call.1} parent=55 // pred_check_branch
          %2252 = sbr.rel (%p2250) target = $region60
        $region59: #{tpu_custom_call.1} parent=55 // pred_region
          %s2253 = sand.u32 %s104, 1
          %s2254 = scalar_lea.sflag [#allocation4], %s2253
          %s2255 = sand.u32 %s104, 1
          %s2256 = smul.addr %s2255, 256
          %s2257 = scalar_lea.vmem [#allocation7], %s2256
          %2258 = dma.done %s2254, 4096
        $region60: #{tpu_custom_call.1} parent=55 // pred_fallthru
          _
        // Predicated region
        $region61: #{tpu_custom_call.1} parent=55 // pred_check
          %p2259 = pneg %p145
        $region62: #{tpu_custom_call.1} parent=55 // pred_check_branch
          %2261 = sbr.rel (%p2259) target = $region64
        $region63: #{tpu_custom_call.1} parent=55 // pred_region
          %s2262 = sand.u32 %s28, 1
          %s2263 = scalar_lea.sflag [#allocation9], %s2262
          %s2264 = sand.u32 %s130, 1
          %s2265 = smul.addr %s2264, 256
          %s2266 = scalar_lea.vmem [#allocation8], %s2265
          %2267 = dma.done %s2263, 4096
        $region64: #{tpu_custom_call.1} parent=55 // pred_fallthru
          _
        // Predicated region
        $region65: #{tpu_custom_call.1} parent=55 // pred_check
          %p2268 = pneg %p171
        $region66: #{tpu_custom_call.1} parent=55 // pred_check_branch
          %2270 = sbr.rel (%p2268) target = $region68
        $region67: #{tpu_custom_call.1} parent=55 // pred_region
          %s2271 = sand.u32 %s28, 1
          %s2272 = scalar_lea.sflag [#allocation9], %s2271
          %s2273 = sand.u32 %s156, 1
          %s2274 = smul.addr %s2273, 256
          %s2275 = scalar_lea.vmem [#allocation10], %s2274
          %2276 = dma.done %s2272, 4096
        $region68: #{tpu_custom_call.1} parent=55 // pred_fallthru
          _
      $region56: #{tpu_custom_call.1} parent=5 // pred_fallthru
        _
    $region6: #{tpu_custom_call.1} parent=1 // loop_footer
      %s26 = sadd.s32 1, %s22
    $region7: #{tpu_custom_call.1} parent=1 // loop_footer_branch
      %21 = sbr.rel target = $region3
    $region8: #{tpu_custom_call.1} parent=1 // loop_exit
      _
    %2277 = vsyncpa [#allocation3], 1
    %s2278 = scalar_lea.sflag [#allocation3], 1
    %2279 = vsyncpa %s2278, 1
    %2280 = vsyncpa [#allocation6], 1
    %2281 = vsyncpa [#allocation4], 1
    %s2282 = scalar_lea.sflag [#allocation4], 1
    %2283 = vsyncpa %s2282, 1
    %2284 = vsyncpa [#allocation9], 1
    %s2285 = scalar_lea.sflag [#allocation9], 1
    %2286 = vsyncpa %s2285, 1

</llo_original>
